<compile_context>
chip_gen: v5e
topology: v5e:2x2
jax: 0.10.0
libtpu: 0.0.40
codegen_flags: <defaults>
</compile_context>

<pallas_src>
import functools

import jax
import jax.numpy as jnp
from jax.experimental import pallas as pl
from jax.experimental.pallas import tpu as pltpu


# -----------------------------------------------------------------------------
# Fused kernel: t_chunk LSTM steps (all layers) + FC head, per grid iteration.
# Gate order inside the kernel is (i, f, o, g) (repacked at init from PyTorch's
# (i, f, g, o)).
# -----------------------------------------------------------------------------
def lstm_fc_kernel(g0_ref, b0_ref, whh0_ref, wihr_ref, whhr_ref, br_ref,
                   h0_ref, c0_ref, w1_ref, b1_ref, w2_ref, b2_ref,
                   out_ref, h_sc, c_sc, hs_sc):
    chunk = pl.program_id(0)

    @pl.when(chunk == 0)
    def _():
        h_sc[...] = h0_ref[...]
        c_sc[...] = c0_ref[...]

    L, bs, H = h_sc.shape
    T = g0_ref.shape[0]
    H4 = 4 * H

    # ---- hoisted time-invariant loads / broadcasts (emitted once per chunk) ----
    whh0 = whh0_ref[...]                                       # (H, 4H) bf16
    b0_b = jnp.broadcast_to(b0_ref[...], (bs, H4))             # (bs, 4H) f32
    wih_r = [wihr_ref[l - 1] for l in range(1, L)]             # (H, 4H) bf16 each
    whh_r = [whhr_ref[l - 1] for l in range(1, L)]             # (H, 4H) bf16 each
    b_r_b = [jnp.broadcast_to(br_ref[l - 1:l, :], (bs, H4))    # (bs, 4H) f32 each
             for l in range(1, L)]

    h = [h_sc[l] for l in range(L)]                            # (bs, H) f32 each
    c = [c_sc[l] for l in range(L)]

    for t in range(T):                                         # static unroll (T<=16)
        x = None
        for l in range(L):                                     # static unroll
            if l == 0:
                # pre-projected input gates (bf16) + f32 bias + recurrent matmul
                gates = (g0_ref[t] + b0_b) + jnp.dot(
                    h[0].astype(jnp.bfloat16), whh0,
                    preferred_element_type=jnp.float32)
            else:
                gates = (jnp.dot(x.astype(jnp.bfloat16), wih_r[l - 1],
                                 preferred_element_type=jnp.float32)
                         + jnp.dot(h[l].astype(jnp.bfloat16), whh_r[l - 1],
                                   preferred_element_type=jnp.float32)
                         + b_r_b[l - 1])
            # gate order (i, f, o, g): sigmoid over the first 3H, tanh over last H
            sig = jax.nn.sigmoid(gates[:, :3 * H])
            i_g = sig[:, 0 * H:1 * H]
            f_g = sig[:, 1 * H:2 * H]
            o_g = sig[:, 2 * H:3 * H]
            g_g = jnp.tanh(gates[:, 3 * H:])
            c_new = f_g * c[l] + i_g * g_g
            h_new = o_g * jnp.tanh(c_new)
            c[l] = c_new
            h[l] = h_new
            x = h_new                                          # feeds next layer
        # top-layer hidden state -> VMEM scratch slab (static slice, vst slot)
        hs_sc[t * bs:(t + 1) * bs, :] = x

    # carry state to the next chunk
    for l in range(L):
        h_sc[l] = h[l]
        c_sc[l] = c[l]

    # ---- FC head on the whole chunk at once: (T*bs, H) rows feed the MXU ----
    hs = hs_sc[...]
    z = jnp.dot(hs.astype(jnp.bfloat16), w1_ref[...],
                preferred_element_type=jnp.float32) + b1_ref[...]
    z = jnp.maximum(z, 0.0)
    # dropout_fc: eval-mode identity
    logits = jnp.dot(z.astype(jnp.bfloat16), w2_ref[...],
                     preferred_element_type=jnp.float32) + b2_ref[...]
    # single whole-block, lane-dense store (V padded to a multiple of 128)
    out_ref[...] = logits.astype(out_ref.dtype)


# -----------------------------------------------------------------------------
# Wrapper
# -----------------------------------------------------------------------------
def sentence_finisher_forward(tokens, params, h0, c0, *, nb_vocab, t_chunk=16):
    bs, seq = tokens.shape
    L, _, H = h0.shape
    gproj = params["gproj"]                                # (V, 4H) bf16
    H4 = gproj.shape[1]
    F = params["w1_t"].shape[1]
    Vp = params["w2_t"].shape[1]                           # padded vocab (mult of 128)
    V = nb_vocab

    t_chunk = min(t_chunk, seq)
    assert seq % t_chunk == 0
    n_chunks = seq // t_chunk
    n_rec = params["wih_r_t"].shape[0]                     # max(L-1, 1)

    # Fused Embedding + layer-0 input projection, gathered directly in time-major
    # layout and streamed as bf16: g0[t, b] = emb[tokens[b, t]] @ W_ih0^T.
    g0 = jnp.take(gproj, tokens.T, axis=0)                 # (seq, bs, 4H) bf16

    out_tm = pl.pallas_call(
        lstm_fc_kernel,
        out_shape=jax.ShapeDtypeStruct((seq * bs, Vp), jnp.float32),
        grid_spec=pltpu.PrefetchScalarGridSpec(
            num_scalar_prefetch=0,
            grid=(n_chunks,),
            in_specs=[
                pl.BlockSpec((t_chunk, bs, H4), lambda c: (c, 0, 0)),   # pre-proj gates
                pl.BlockSpec((1, H4), lambda c: (0, 0)),                # layer-0 bias
                pl.BlockSpec((H, H4), lambda c: (0, 0)),                # W_hh layer 0
                pl.BlockSpec((n_rec, H, H4), lambda c: (0, 0, 0)),      # W_ih layers>0
                pl.BlockSpec((n_rec, H, H4), lambda c: (0, 0, 0)),      # W_hh layers>0
                pl.BlockSpec((n_rec, H4), lambda c: (0, 0)),            # biases layers>0
                pl.BlockSpec((L, bs, H), lambda c: (0, 0, 0)),          # h0
                pl.BlockSpec((L, bs, H), lambda c: (0, 0, 0)),          # c0
                pl.BlockSpec((H, F), lambda c: (0, 0)),                 # w1^T
                pl.BlockSpec((1, F), lambda c: (0, 0)),                 # b1
                pl.BlockSpec((F, Vp), lambda c: (0, 0)),                # w2^T (padded V)
                pl.BlockSpec((1, Vp), lambda c: (0, 0)),                # b2 (padded V)
            ],
            out_specs=pl.BlockSpec((t_chunk * bs, Vp), lambda c: (c, 0)),
            scratch_shapes=[pltpu.VMEM((L, bs, H), jnp.float32),        # h state
                            pltpu.VMEM((L, bs, H), jnp.float32),        # c state
                            pltpu.VMEM((t_chunk * bs, H), jnp.float32)],  # top-layer h
        ),
        compiler_params=pltpu.CompilerParams(
            dimension_semantics=("arbitrary",),
            vmem_limit_bytes=32 * 1024 * 1024),
    )(g0, params["b0"], params["whh0_t"], params["wih_r_t"], params["whh_r_t"],
      params["b_rest"], h0, c0, params["w1_t"], params["b1"], params["w2_t"],
      params["b2"])

    # time-major flattened (row = t*bs + b) -> PyTorch batch-first (row = b*seq + t),
    # dropping the vocab padding.
    out = out_tm.reshape(seq, bs, Vp)[:, :, :V]
    return jnp.transpose(out, (1, 0, 2)).reshape(bs * seq, V)


def init_params(key, nb_vocab, embed_dims, nb_layers, hidden_lstm, hidden_fc):
    ks = jax.random.split(key, 10)
    scale = 0.1
    E, H, L, F, V = embed_dims, hidden_lstm, nb_layers, hidden_fc, nb_vocab

    embedding = scale * jax.random.normal(ks[0], (V, E), jnp.float32)
    embedding = embedding.at[0].set(0.0)                   # padding_idx=0

    wih0 = scale * jax.random.normal(ks[1], (4 * H, E), jnp.float32)
    wihr = scale * jax.random.normal(ks[2], (max(L - 1, 0), 4 * H, H), jnp.float32)
    whh = scale * jax.random.normal(ks[3], (L, 4 * H, H), jnp.float32)
    b_ih = scale * jax.random.normal(ks[4], (L, 4 * H), jnp.float32)
    b_hh = scale * jax.random.normal(ks[5], (L, 4 * H), jnp.float32)
    b = b_ih + b_hh                                        # (L, 4H)

    w1 = scale * jax.random.normal(ks[6], (F, H), jnp.float32)
    b1 = scale * jax.random.normal(ks[7], (F,), jnp.float32)
    w2 = scale * jax.random.normal(ks[8], (V, F), jnp.float32)
    b2 = scale * jax.random.normal(ks[9], (V,), jnp.float32)

    # ---- one-time exact repacking ----
    # 1) gate reorder (i, f, g, o) -> (i, f, o, g): contiguous sigmoid/tanh slabs.
    def reorder(w, axis):
        i, f, g, o = jnp.split(w, 4, axis=axis)
        return jnp.concatenate([i, f, o, g], axis=axis)

    wih0 = reorder(wih0, 0)
    wihr = reorder(wihr, 1)
    whh = reorder(whh, 1)
    b = reorder(b, 1)

    # 2) Embedding + layer-0 input projection folded into one lookup table (bf16);
    #    the layer-0 bias stays separate in f32 and is added inside the kernel.
    gproj = (embedding @ wih0.T).astype(jnp.bfloat16)      # (V, 4H)

    # 3) Layers > 0: keep W_ih / W_hh as separate transposed blocks (no per-step
    #    lane concat in the kernel).
    if L > 1:
        wih_r_t = jnp.transpose(wihr, (0, 2, 1))           # (L-1, H, 4H)
        whh_r_t = jnp.transpose(whh[1:], (0, 2, 1))        # (L-1, H, 4H)
        b_rest = b[1:]                                     # (L-1, 4H)
    else:                                                  # unused dummies (never read)
        wih_r_t = jnp.zeros((1, H, 4 * H), jnp.float32)
        whh_r_t = jnp.zeros((1, H, 4 * H), jnp.float32)
        b_rest = jnp.zeros((1, 4 * H), jnp.float32)

    # 4) Pad the vocab axis of the FC head to a multiple of 128 so the kernel's
    #    output store is lane-dense and unmasked (padding sliced off in wrapper).
    Vp = ((V + 127) // 128) * 128
    w2_pad = jnp.zeros((Vp, F), jnp.float32).at[:V].set(w2)
    b2_pad = jnp.zeros((Vp,), jnp.float32).at[:V].set(b2)

    return {
        "gproj": gproj,                                    # (V, 4H) bf16
        "b0": b[0][None, :],                               # (1, 4H) f32
        "whh0_t": whh[0].T.astype(jnp.bfloat16),           # (H, 4H)
        "wih_r_t": wih_r_t.astype(jnp.bfloat16),           # (max(L-1,1), H, 4H)
        "whh_r_t": whh_r_t.astype(jnp.bfloat16),           # (max(L-1,1), H, 4H)
        "b_rest": b_rest,                                  # (max(L-1,1), 4H) f32
        "w1_t": w1.T.astype(jnp.bfloat16),                 # (H, F)
        "b1": b1[None, :],                                 # (1, F) f32
        "w2_t": w2_pad.T.astype(jnp.bfloat16),             # (F, Vp)
        "b2": b2_pad[None, :],                             # (1, Vp) f32
    }


if __name__ == "__main__":
    # Small, module-consistent config.
    nb_vocab, embed_dims, nb_layers = 32, 16, 2
    hidden_lstm, hidden_fc = 32, 32
    bs, seq = 2, 8

    key = jax.random.PRNGKey(0)
    k_param, k_tok, k_h, k_c = jax.random.split(key, 4)

    params = init_params(k_param, nb_vocab, embed_dims, nb_layers,
                         hidden_lstm, hidden_fc)

    tokens = jax.random.randint(k_tok, (bs, seq), 0, nb_vocab, dtype=jnp.int32)
    # init_lstm_states: randn hidden/cell, drawn deterministically here.
    h0 = jax.random.normal(k_h, (nb_layers, bs, hidden_lstm), jnp.float32)
    c0 = jax.random.normal(k_c, (nb_layers, bs, hidden_lstm), jnp.float32)

    fwd = jax.jit(functools.partial(sentence_finisher_forward,
                                    nb_vocab=nb_vocab, t_chunk=16))
    logits = fwd(tokens, params, h0, c0)
    jax.block_until_ready(logits)

    assert logits.shape == (bs * seq, nb_vocab), logits.shape
    print("KERNEL_OK")
</pallas_src>

<mosaic_0001>
module attributes {stable_mosaic.version = 11 : i64} {
  func.func @lstm_fc_kernel(%arg0: i32, %arg1: memref<8x2x128xbf16, #tpu.memory_space<vmem>>, %arg2: memref<1x128xf32, #tpu.memory_space<vmem>>, %arg3: memref<32x128xbf16, #tpu.memory_space<vmem>>, %arg4: memref<1x32x128xbf16, #tpu.memory_space<vmem>>, %arg5: memref<1x32x128xbf16, #tpu.memory_space<vmem>>, %arg6: memref<1x128xf32, #tpu.memory_space<vmem>>, %arg7: memref<2x2x32xf32, #tpu.memory_space<vmem>>, %arg8: memref<2x2x32xf32, #tpu.memory_space<vmem>>, %arg9: memref<32x32xbf16, #tpu.memory_space<vmem>>, %arg10: memref<1x32xf32, #tpu.memory_space<vmem>>, %arg11: memref<32x128xbf16, #tpu.memory_space<vmem>>, %arg12: memref<1x128xf32, #tpu.memory_space<vmem>>, %arg13: memref<16x128xf32, #tpu.memory_space<vmem>>, %arg14: memref<2x2x32xf32, #tpu.memory_space<vmem>>, %arg15: memref<2x2x32xf32, #tpu.memory_space<vmem>>, %arg16: memref<16x32xf32, #tpu.memory_space<vmem>>) attributes {dimension_semantics = [#tpu.dimension_semantics<arbitrary>], iteration_bounds = array<i64: 1>, scalar_prefetch = 0 : i64, scratch_operands = 3 : i64, tpu.core_type = #tpu.core_type<tc>, window_params = [{transform_indices = @transform_0, window_bounds = array<i64: 8, 2, 128>}, {pipeline_mode = #tpu.pipeline_mode<synchronous>, transform_indices = @transform_1, window_bounds = array<i64: 1, 128>}, {pipeline_mode = #tpu.pipeline_mode<synchronous>, transform_indices = @transform_2, window_bounds = array<i64: 32, 128>}, {pipeline_mode = #tpu.pipeline_mode<synchronous>, transform_indices = @transform_3, window_bounds = array<i64: 1, 32, 128>}, {pipeline_mode = #tpu.pipeline_mode<synchronous>, transform_indices = @transform_4, window_bounds = array<i64: 1, 32, 128>}, {pipeline_mode = #tpu.pipeline_mode<synchronous>, transform_indices = @transform_5, window_bounds = array<i64: 1, 128>}, {pipeline_mode = #tpu.pipeline_mode<synchronous>, transform_indices = @transform_6, window_bounds = array<i64: 2, 2, 32>}, {pipeline_mode = #tpu.pipeline_mode<synchronous>, transform_indices = @transform_7, window_bounds = array<i64: 2, 2, 32>}, {pipeline_mode = #tpu.pipeline_mode<synchronous>, transform_indices = @transform_8, window_bounds = array<i64: 32, 32>}, {pipeline_mode = #tpu.pipeline_mode<synchronous>, transform_indices = @transform_9, window_bounds = array<i64: 1, 32>}, {pipeline_mode = #tpu.pipeline_mode<synchronous>, transform_indices = @transform_10, window_bounds = array<i64: 32, 128>}, {pipeline_mode = #tpu.pipeline_mode<synchronous>, transform_indices = @transform_11, window_bounds = array<i64: 1, 128>}, {transform_indices = @transform_12, window_bounds = array<i64: 16, 128>}]} {
    %c0_i32 = arith.constant 0 : i32
    %0 = arith.cmpi eq, %arg0, %c0_i32 : i32
    %1 = arith.extui %0 : i1 to i32
    %c0_i32_0 = arith.constant 0 : i32
    %2 = arith.cmpi ne, %1, %c0_i32_0 : i32
    scf.if %2 {
      %c0_119 = arith.constant 0 : index
      %c0_120 = arith.constant 0 : index
      %c0_121 = arith.constant 0 : index
      %418 = vector.load %arg7[%c0_119, %c0_120, %c0_121] : memref<2x2x32xf32, #tpu.memory_space<vmem>>, vector<2x2x32xf32>
      %c0_122 = arith.constant 0 : index
      %c0_123 = arith.constant 0 : index
      %c0_124 = arith.constant 0 : index
      %419 = vector.load %arg14[%c0_122, %c0_123, %c0_124] : memref<2x2x32xf32, #tpu.memory_space<vmem>>, vector<2x2x32xf32>
      tpu.vector_store %arg14[%c0_122, %c0_123, %c0_124], %418 {strides = array<i32>} : memref<2x2x32xf32, #tpu.memory_space<vmem>>, vector<2x2x32xf32>,
      %c0_125 = arith.constant 0 : index
      %c0_126 = arith.constant 0 : index
      %c0_127 = arith.constant 0 : index
      %420 = vector.load %arg8[%c0_125, %c0_126, %c0_127] : memref<2x2x32xf32, #tpu.memory_space<vmem>>, vector<2x2x32xf32>
      %c0_128 = arith.constant 0 : index
      %c0_129 = arith.constant 0 : index
      %c0_130 = arith.constant 0 : index
      %421 = vector.load %arg15[%c0_128, %c0_129, %c0_130] : memref<2x2x32xf32, #tpu.memory_space<vmem>>, vector<2x2x32xf32>
      tpu.vector_store %arg15[%c0_128, %c0_129, %c0_130], %420 {strides = array<i32>} : memref<2x2x32xf32, #tpu.memory_space<vmem>>, vector<2x2x32xf32>,
    } else {
    }
    %c0 = arith.constant 0 : index
    %c0_1 = arith.constant 0 : index
    %3 = vector.load %arg3[%c0, %c0_1] : memref<32x128xbf16, #tpu.memory_space<vmem>>, vector<32x128xbf16>
    %c0_2 = arith.constant 0 : index
    %c0_3 = arith.constant 0 : index
    %4 = vector.load %arg2[%c0_2, %c0_3] : memref<1x128xf32, #tpu.memory_space<vmem>>, vector<1x128xf32>
    %5 = vector.shape_cast %4 : vector<1x128xf32> to vector<1x128xf32>
    %6 = vector.broadcast %5 : vector<1x128xf32> to vector<2x128xf32>
    %c0_4 = arith.constant 0 : index
    %c0_5 = arith.constant 0 : index
    %c0_6 = arith.constant 0 : index
    %7 = vector.load %arg4[%c0_4, %c0_5, %c0_6] : memref<1x32x128xbf16, #tpu.memory_space<vmem>>, vector<1x32x128xbf16>
    %8 = vector.shape_cast %7 : vector<1x32x128xbf16> to vector<32x128xbf16>
    %c0_7 = arith.constant 0 : index
    %c0_8 = arith.constant 0 : index
    %c0_9 = arith.constant 0 : index
    %9 = vector.load %arg5[%c0_7, %c0_8, %c0_9] : memref<1x32x128xbf16, #tpu.memory_space<vmem>>, vector<1x32x128xbf16>
    %10 = vector.shape_cast %9 : vector<1x32x128xbf16> to vector<32x128xbf16>
    %c0_10 = arith.constant 0 : index
    %c0_11 = arith.constant 0 : index
    %11 = vector.load %arg6[%c0_10, %c0_11] : memref<1x128xf32, #tpu.memory_space<vmem>>, vector<1x128xf32>
    %12 = vector.shape_cast %11 : vector<1x128xf32> to vector<1x128xf32>
    %13 = vector.broadcast %12 : vector<1x128xf32> to vector<2x128xf32>
    %c0_12 = arith.constant 0 : index
    %c0_13 = arith.constant 0 : index
    %c0_14 = arith.constant 0 : index
    %14 = vector.load %arg14[%c0_12, %c0_13, %c0_14] : memref<2x2x32xf32, #tpu.memory_space<vmem>>, vector<1x2x32xf32>
    %15 = vector.shape_cast %14 : vector<1x2x32xf32> to vector<2x32xf32>
    %c1 = arith.constant 1 : index
    %c0_15 = arith.constant 0 : index
    %c0_16 = arith.constant 0 : index
    %16 = vector.load %arg14[%c1, %c0_15, %c0_16] : memref<2x2x32xf32, #tpu.memory_space<vmem>>, vector<1x2x32xf32>
    %17 = vector.shape_cast %16 : vector<1x2x32xf32> to vector<2x32xf32>
    %c0_17 = arith.constant 0 : index
    %c0_18 = arith.constant 0 : index
    %c0_19 = arith.constant 0 : index
    %18 = vector.load %arg15[%c0_17, %c0_18, %c0_19] : memref<2x2x32xf32, #tpu.memory_space<vmem>>, vector<1x2x32xf32>
    %19 = vector.shape_cast %18 : vector<1x2x32xf32> to vector<2x32xf32>
    %c1_20 = arith.constant 1 : index
    %c0_21 = arith.constant 0 : index
    %c0_22 = arith.constant 0 : index
    %20 = vector.load %arg15[%c1_20, %c0_21, %c0_22] : memref<2x2x32xf32, #tpu.memory_space<vmem>>, vector<1x2x32xf32>
    %21 = vector.shape_cast %20 : vector<1x2x32xf32> to vector<2x32xf32>
    %c0_23 = arith.constant 0 : index
    %c0_24 = arith.constant 0 : index
    %c0_25 = arith.constant 0 : index
    %22 = vector.load %arg1[%c0_23, %c0_24, %c0_25] : memref<8x2x128xbf16, #tpu.memory_space<vmem>>, vector<1x2x128xbf16>
    %23 = vector.shape_cast %22 : vector<1x2x128xbf16> to vector<2x128xbf16>
    %24 = arith.extf %23 : vector<2x128xbf16> to vector<2x128xf32>
    %25 = arith.addf %24, %6 : vector<2x128xf32>
    %26 = arith.truncf %15 : vector<2x32xf32> to vector<2x32xbf16>
    %cst = arith.constant dense<0.000000e+00> : vector<2x128xf32>
    %27 = tpu.matmul %26, %3, %cst {dimension_numbers = #tpu.dot_dimension_numbers<[1], [0], [0], [1], [0, 0, 1, 1], [], []>} : vector<2x32xbf16>, vector<32x128xbf16>, vector<2x128xf32> -> vector<2x128xf32>
    %28 = arith.addf %25, %27 : vector<2x128xf32>
    %29 = vector.extract_strided_slice %28 {offsets = [0, 0], sizes = [2, 96], strides = [1, 1]} : vector<2x128xf32> to vector<2x96xf32>
    %30 = arith.negf %29 : vector<2x96xf32>
    %31 = math.exp %30 : vector<2x96xf32>
    %cst_26 = arith.constant 1.000000e+00 : f32
    %32 = vector.broadcast %cst_26 : f32 to vector<2x96xf32>
    %33 = arith.addf %32, %31 : vector<2x96xf32>
    %34 = arith.divf %32, %33 : vector<2x96xf32>
    %35 = vector.extract_strided_slice %34 {offsets = [0, 0], sizes = [2, 32], strides = [1, 1]} : vector<2x96xf32> to vector<2x32xf32>
    %36 = vector.extract_strided_slice %34 {offsets = [0, 32], sizes = [2, 32], strides = [1, 1]} : vector<2x96xf32> to vector<2x32xf32>
    %37 = vector.extract_strided_slice %34 {offsets = [0, 64], sizes = [2, 32], strides = [1, 1]} : vector<2x96xf32> to vector<2x32xf32>
    %38 = vector.extract_strided_slice %28 {offsets = [0, 96], sizes = [2, 32], strides = [1, 1]} : vector<2x128xf32> to vector<2x32xf32>
    %39 = math.tanh %38 : vector<2x32xf32>
    %40 = arith.mulf %36, %19 : vector<2x32xf32>
    %41 = arith.mulf %35, %39 : vector<2x32xf32>
    %42 = arith.addf %40, %41 : vector<2x32xf32>
    %43 = math.tanh %42 : vector<2x32xf32>
    %44 = arith.mulf %37, %43 : vector<2x32xf32>
    %45 = arith.truncf %44 : vector<2x32xf32> to vector<2x32xbf16>
    %cst_27 = arith.constant dense<0.000000e+00> : vector<2x128xf32>
    %46 = tpu.matmul %45, %8, %cst_27 {dimension_numbers = #tpu.dot_dimension_numbers<[1], [0], [0], [1], [0, 0, 1, 1], [], []>} : vector<2x32xbf16>, vector<32x128xbf16>, vector<2x128xf32> -> vector<2x128xf32>
    %47 = arith.truncf %17 : vector<2x32xf32> to vector<2x32xbf16>
    %cst_28 = arith.constant dense<0.000000e+00> : vector<2x128xf32>
    %48 = tpu.matmul %47, %10, %cst_28 {dimension_numbers = #tpu.dot_dimension_numbers<[1], [0], [0], [1], [0, 0, 1, 1], [], []>} : vector<2x32xbf16>, vector<32x128xbf16>, vector<2x128xf32> -> vector<2x128xf32>
    %49 = arith.addf %46, %48 : vector<2x128xf32>
    %50 = arith.addf %49, %13 : vector<2x128xf32>
    %51 = vector.extract_strided_slice %50 {offsets = [0, 0], sizes = [2, 96], strides = [1, 1]} : vector<2x128xf32> to vector<2x96xf32>
    %52 = arith.negf %51 : vector<2x96xf32>
    %53 = math.exp %52 : vector<2x96xf32>
    %cst_29 = arith.constant 1.000000e+00 : f32
    %54 = vector.broadcast %cst_29 : f32 to vector<2x96xf32>
    %55 = arith.addf %54, %53 : vector<2x96xf32>
    %56 = arith.divf %54, %55 : vector<2x96xf32>
    %57 = vector.extract_strided_slice %56 {offsets = [0, 0], sizes = [2, 32], strides = [1, 1]} : vector<2x96xf32> to vector<2x32xf32>
    %58 = vector.extract_strided_slice %56 {offsets = [0, 32], sizes = [2, 32], strides = [1, 1]} : vector<2x96xf32> to vector<2x32xf32>
    %59 = vector.extract_strided_slice %56 {offsets = [0, 64], sizes = [2, 32], strides = [1, 1]} : vector<2x96xf32> to vector<2x32xf32>
    %60 = vector.extract_strided_slice %50 {offsets = [0, 96], sizes = [2, 32], strides = [1, 1]} : vector<2x128xf32> to vector<2x32xf32>
    %61 = math.tanh %60 : vector<2x32xf32>
    %62 = arith.mulf %58, %21 : vector<2x32xf32>
    %63 = arith.mulf %57, %61 : vector<2x32xf32>
    %64 = arith.addf %62, %63 : vector<2x32xf32>
    %65 = math.tanh %64 : vector<2x32xf32>
    %66 = arith.mulf %59, %65 : vector<2x32xf32>
    %c0_30 = arith.constant 0 : index
    %c0_31 = arith.constant 0 : index
    %67 = vector.load %arg16[%c0_30, %c0_31] : memref<16x32xf32, #tpu.memory_space<vmem>>, vector<2x32xf32>
    tpu.vector_store %arg16[%c0_30, %c0_31], %66 {strides = array<i32>} : memref<16x32xf32, #tpu.memory_space<vmem>>, vector<2x32xf32>,
    %c1_32 = arith.constant 1 : index
    %c0_33 = arith.constant 0 : index
    %c0_34 = arith.constant 0 : index
    %68 = vector.load %arg1[%c1_32, %c0_33, %c0_34] : memref<8x2x128xbf16, #tpu.memory_space<vmem>>, vector<1x2x128xbf16>
    %69 = vector.shape_cast %68 : vector<1x2x128xbf16> to vector<2x128xbf16>
    %70 = arith.extf %69 : vector<2x128xbf16> to vector<2x128xf32>
    %71 = arith.addf %70, %6 : vector<2x128xf32>
    %72 = arith.truncf %44 : vector<2x32xf32> to vector<2x32xbf16>
    %cst_35 = arith.constant dense<0.000000e+00> : vector<2x128xf32>
    %73 = tpu.matmul %72, %3, %cst_35 {dimension_numbers = #tpu.dot_dimension_numbers<[1], [0], [0], [1], [0, 0, 1, 1], [], []>} : vector<2x32xbf16>, vector<32x128xbf16>, vector<2x128xf32> -> vector<2x128xf32>
    %74 = arith.addf %71, %73 : vector<2x128xf32>
    %75 = vector.extract_strided_slice %74 {offsets = [0, 0], sizes = [2, 96], strides = [1, 1]} : vector<2x128xf32> to vector<2x96xf32>
    %76 = arith.negf %75 : vector<2x96xf32>
    %77 = math.exp %76 : vector<2x96xf32>
    %cst_36 = arith.constant 1.000000e+00 : f32
    %78 = vector.broadcast %cst_36 : f32 to vector<2x96xf32>
    %79 = arith.addf %78, %77 : vector<2x96xf32>
    %80 = arith.divf %78, %79 : vector<2x96xf32>
    %81 = vector.extract_strided_slice %80 {offsets = [0, 0], sizes = [2, 32], strides = [1, 1]} : vector<2x96xf32> to vector<2x32xf32>
    %82 = vector.extract_strided_slice %80 {offsets = [0, 32], sizes = [2, 32], strides = [1, 1]} : vector<2x96xf32> to vector<2x32xf32>
    %83 = vector.extract_strided_slice %80 {offsets = [0, 64], sizes = [2, 32], strides = [1, 1]} : vector<2x96xf32> to vector<2x32xf32>
    %84 = vector.extract_strided_slice %74 {offsets = [0, 96], sizes = [2, 32], strides = [1, 1]} : vector<2x128xf32> to vector<2x32xf32>
    %85 = math.tanh %84 : vector<2x32xf32>
    %86 = arith.mulf %82, %42 : vector<2x32xf32>
    %87 = arith.mulf %81, %85 : vector<2x32xf32>
    %88 = arith.addf %86, %87 : vector<2x32xf32>
    %89 = math.tanh %88 : vector<2x32xf32>
    %90 = arith.mulf %83, %89 : vector<2x32xf32>
    %91 = arith.truncf %90 : vector<2x32xf32> to vector<2x32xbf16>
    %cst_37 = arith.constant dense<0.000000e+00> : vector<2x128xf32>
    %92 = tpu.matmul %91, %8, %cst_37 {dimension_numbers = #tpu.dot_dimension_numbers<[1], [0], [0], [1], [0, 0, 1, 1], [], []>} : vector<2x32xbf16>, vector<32x128xbf16>, vector<2x128xf32> -> vector<2x128xf32>
    %93 = arith.truncf %66 : vector<2x32xf32> to vector<2x32xbf16>
    %cst_38 = arith.constant dense<0.000000e+00> : vector<2x128xf32>
    %94 = tpu.matmul %93, %10, %cst_38 {dimension_numbers = #tpu.dot_dimension_numbers<[1], [0], [0], [1], [0, 0, 1, 1], [], []>} : vector<2x32xbf16>, vector<32x128xbf16>, vector<2x128xf32> -> vector<2x128xf32>
    %95 = arith.addf %92, %94 : vector<2x128xf32>
    %96 = arith.addf %95, %13 : vector<2x128xf32>
    %97 = vector.extract_strided_slice %96 {offsets = [0, 0], sizes = [2, 96], strides = [1, 1]} : vector<2x128xf32> to vector<2x96xf32>
    %98 = arith.negf %97 : vector<2x96xf32>
    %99 = math.exp %98 : vector<2x96xf32>
    %cst_39 = arith.constant 1.000000e+00 : f32
    %100 = vector.broadcast %cst_39 : f32 to vector<2x96xf32>
    %101 = arith.addf %100, %99 : vector<2x96xf32>
    %102 = arith.divf %100, %101 : vector<2x96xf32>
    %103 = vector.extract_strided_slice %102 {offsets = [0, 0], sizes = [2, 32], strides = [1, 1]} : vector<2x96xf32> to vector<2x32xf32>
    %104 = vector.extract_strided_slice %102 {offsets = [0, 32], sizes = [2, 32], strides = [1, 1]} : vector<2x96xf32> to vector<2x32xf32>
    %105 = vector.extract_strided_slice %102 {offsets = [0, 64], sizes = [2, 32], strides = [1, 1]} : vector<2x96xf32> to vector<2x32xf32>
    %106 = vector.extract_strided_slice %96 {offsets = [0, 96], sizes = [2, 32], strides = [1, 1]} : vector<2x128xf32> to vector<2x32xf32>
    %107 = math.tanh %106 : vector<2x32xf32>
    %108 = arith.mulf %104, %64 : vector<2x32xf32>
    %109 = arith.mulf %103, %107 : vector<2x32xf32>
    %110 = arith.addf %108, %109 : vector<2x32xf32>
    %111 = math.tanh %110 : vector<2x32xf32>
    %112 = arith.mulf %105, %111 : vector<2x32xf32>
    %c2 = arith.constant 2 : index
    %c0_40 = arith.constant 0 : index
    %113 = vector.load %arg16[%c2, %c0_40] : memref<16x32xf32, #tpu.memory_space<vmem>>, vector<2x32xf32>
    tpu.vector_store %arg16[%c2, %c0_40], %112 {strides = array<i32>} : memref<16x32xf32, #tpu.memory_space<vmem>>, vector<2x32xf32>,
    %c2_41 = arith.constant 2 : index
    %c0_42 = arith.constant 0 : index
    %c0_43 = arith.constant 0 : index
    %114 = vector.load %arg1[%c2_41, %c0_42, %c0_43] : memref<8x2x128xbf16, #tpu.memory_space<vmem>>, vector<1x2x128xbf16>
    %115 = vector.shape_cast %114 : vector<1x2x128xbf16> to vector<2x128xbf16>
    %116 = arith.extf %115 : vector<2x128xbf16> to vector<2x128xf32>
    %117 = arith.addf %116, %6 : vector<2x128xf32>
    %118 = arith.truncf %90 : vector<2x32xf32> to vector<2x32xbf16>
    %cst_44 = arith.constant dense<0.000000e+00> : vector<2x128xf32>
    %119 = tpu.matmul %118, %3, %cst_44 {dimension_numbers = #tpu.dot_dimension_numbers<[1], [0], [0], [1], [0, 0, 1, 1], [], []>} : vector<2x32xbf16>, vector<32x128xbf16>, vector<2x128xf32> -> vector<2x128xf32>
    %120 = arith.addf %117, %119 : vector<2x128xf32>
    %121 = vector.extract_strided_slice %120 {offsets = [0, 0], sizes = [2, 96], strides = [1, 1]} : vector<2x128xf32> to vector<2x96xf32>
    %122 = arith.negf %121 : vector<2x96xf32>
    %123 = math.exp %122 : vector<2x96xf32>
    %cst_45 = arith.constant 1.000000e+00 : f32
    %124 = vector.broadcast %cst_45 : f32 to vector<2x96xf32>
    %125 = arith.addf %124, %123 : vector<2x96xf32>
    %126 = arith.divf %124, %125 : vector<2x96xf32>
    %127 = vector.extract_strided_slice %126 {offsets = [0, 0], sizes = [2, 32], strides = [1, 1]} : vector<2x96xf32> to vector<2x32xf32>
    %128 = vector.extract_strided_slice %126 {offsets = [0, 32], sizes = [2, 32], strides = [1, 1]} : vector<2x96xf32> to vector<2x32xf32>
    %129 = vector.extract_strided_slice %126 {offsets = [0, 64], sizes = [2, 32], strides = [1, 1]} : vector<2x96xf32> to vector<2x32xf32>
    %130 = vector.extract_strided_slice %120 {offsets = [0, 96], sizes = [2, 32], strides = [1, 1]} : vector<2x128xf32> to vector<2x32xf32>
    %131 = math.tanh %130 : vector<2x32xf32>
    %132 = arith.mulf %128, %88 : vector<2x32xf32>
    %133 = arith.mulf %127, %131 : vector<2x32xf32>
    %134 = arith.addf %132, %133 : vector<2x32xf32>
    %135 = math.tanh %134 : vector<2x32xf32>
    %136 = arith.mulf %129, %135 : vector<2x32xf32>
    %137 = arith.truncf %136 : vector<2x32xf32> to vector<2x32xbf16>
    %cst_46 = arith.constant dense<0.000000e+00> : vector<2x128xf32>
    %138 = tpu.matmul %137, %8, %cst_46 {dimension_numbers = #tpu.dot_dimension_numbers<[1], [0], [0], [1], [0, 0, 1, 1], [], []>} : vector<2x32xbf16>, vector<32x128xbf16>, vector<2x128xf32> -> vector<2x128xf32>
    %139 = arith.truncf %112 : vector<2x32xf32> to vector<2x32xbf16>
    %cst_47 = arith.constant dense<0.000000e+00> : vector<2x128xf32>
    %140 = tpu.matmul %139, %10, %cst_47 {dimension_numbers = #tpu.dot_dimension_numbers<[1], [0], [0], [1], [0, 0, 1, 1], [], []>} : vector<2x32xbf16>, vector<32x128xbf16>, vector<2x128xf32> -> vector<2x128xf32>
    %141 = arith.addf %138, %140 : vector<2x128xf32>
    %142 = arith.addf %141, %13 : vector<2x128xf32>
    %143 = vector.extract_strided_slice %142 {offsets = [0, 0], sizes = [2, 96], strides = [1, 1]} : vector<2x128xf32> to vector<2x96xf32>
    %144 = arith.negf %143 : vector<2x96xf32>
    %145 = math.exp %144 : vector<2x96xf32>
    %cst_48 = arith.constant 1.000000e+00 : f32
    %146 = vector.broadcast %cst_48 : f32 to vector<2x96xf32>
    %147 = arith.addf %146, %145 : vector<2x96xf32>
    %148 = arith.divf %146, %147 : vector<2x96xf32>
    %149 = vector.extract_strided_slice %148 {offsets = [0, 0], sizes = [2, 32], strides = [1, 1]} : vector<2x96xf32> to vector<2x32xf32>
    %150 = vector.extract_strided_slice %148 {offsets = [0, 32], sizes = [2, 32], strides = [1, 1]} : vector<2x96xf32> to vector<2x32xf32>
    %151 = vector.extract_strided_slice %148 {offsets = [0, 64], sizes = [2, 32], strides = [1, 1]} : vector<2x96xf32> to vector<2x32xf32>
    %152 = vector.extract_strided_slice %142 {offsets = [0, 96], sizes = [2, 32], strides = [1, 1]} : vector<2x128xf32> to vector<2x32xf32>
    %153 = math.tanh %152 : vector<2x32xf32>
    %154 = arith.mulf %150, %110 : vector<2x32xf32>
    %155 = arith.mulf %149, %153 : vector<2x32xf32>
    %156 = arith.addf %154, %155 : vector<2x32xf32>
    %157 = math.tanh %156 : vector<2x32xf32>
    %158 = arith.mulf %151, %157 : vector<2x32xf32>
    %c4 = arith.constant 4 : index
    %c0_49 = arith.constant 0 : index
    %159 = vector.load %arg16[%c4, %c0_49] : memref<16x32xf32, #tpu.memory_space<vmem>>, vector<2x32xf32>
    tpu.vector_store %arg16[%c4, %c0_49], %158 {strides = array<i32>} : memref<16x32xf32, #tpu.memory_space<vmem>>, vector<2x32xf32>,
    %c3 = arith.constant 3 : index
    %c0_50 = arith.constant 0 : index
    %c0_51 = arith.constant 0 : index
    %160 = vector.load %arg1[%c3, %c0_50, %c0_51] : memref<8x2x128xbf16, #tpu.memory_space<vmem>>, vector<1x2x128xbf16>
    %161 = vector.shape_cast %160 : vector<1x2x128xbf16> to vector<2x128xbf16>
    %162 = arith.extf %161 : vector<2x128xbf16> to vector<2x128xf32>
    %163 = arith.addf %162, %6 : vector<2x128xf32>
    %164 = arith.truncf %136 : vector<2x32xf32> to vector<2x32xbf16>
    %cst_52 = arith.constant dense<0.000000e+00> : vector<2x128xf32>
    %165 = tpu.matmul %164, %3, %cst_52 {dimension_numbers = #tpu.dot_dimension_numbers<[1], [0], [0], [1], [0, 0, 1, 1], [], []>} : vector<2x32xbf16>, vector<32x128xbf16>, vector<2x128xf32> -> vector<2x128xf32>
    %166 = arith.addf %163, %165 : vector<2x128xf32>
    %167 = vector.extract_strided_slice %166 {offsets = [0, 0], sizes = [2, 96], strides = [1, 1]} : vector<2x128xf32> to vector<2x96xf32>
    %168 = arith.negf %167 : vector<2x96xf32>
    %169 = math.exp %168 : vector<2x96xf32>
    %cst_53 = arith.constant 1.000000e+00 : f32
    %170 = vector.broadcast %cst_53 : f32 to vector<2x96xf32>
    %171 = arith.addf %170, %169 : vector<2x96xf32>
    %172 = arith.divf %170, %171 : vector<2x96xf32>
    %173 = vector.extract_strided_slice %172 {offsets = [0, 0], sizes = [2, 32], strides = [1, 1]} : vector<2x96xf32> to vector<2x32xf32>
    %174 = vector.extract_strided_slice %172 {offsets = [0, 32], sizes = [2, 32], strides = [1, 1]} : vector<2x96xf32> to vector<2x32xf32>
    %175 = vector.extract_strided_slice %172 {offsets = [0, 64], sizes = [2, 32], strides = [1, 1]} : vector<2x96xf32> to vector<2x32xf32>
    %176 = vector.extract_strided_slice %166 {offsets = [0, 96], sizes = [2, 32], strides = [1, 1]} : vector<2x128xf32> to vector<2x32xf32>
    %177 = math.tanh %176 : vector<2x32xf32>
    %178 = arith.mulf %174, %134 : vector<2x32xf32>
    %179 = arith.mulf %173, %177 : vector<2x32xf32>
    %180 = arith.addf %178, %179 : vector<2x32xf32>
    %181 = math.tanh %180 : vector<2x32xf32>
    %182 = arith.mulf %175, %181 : vector<2x32xf32>
    %183 = arith.truncf %182 : vector<2x32xf32> to vector<2x32xbf16>
    %cst_54 = arith.constant dense<0.000000e+00> : vector<2x128xf32>
    %184 = tpu.matmul %183, %8, %cst_54 {dimension_numbers = #tpu.dot_dimension_numbers<[1], [0], [0], [1], [0, 0, 1, 1], [], []>} : vector<2x32xbf16>, vector<32x128xbf16>, vector<2x128xf32> -> vector<2x128xf32>
    %185 = arith.truncf %158 : vector<2x32xf32> to vector<2x32xbf16>
    %cst_55 = arith.constant dense<0.000000e+00> : vector<2x128xf32>
    %186 = tpu.matmul %185, %10, %cst_55 {dimension_numbers = #tpu.dot_dimension_numbers<[1], [0], [0], [1], [0, 0, 1, 1], [], []>} : vector<2x32xbf16>, vector<32x128xbf16>, vector<2x128xf32> -> vector<2x128xf32>
    %187 = arith.addf %184, %186 : vector<2x128xf32>
    %188 = arith.addf %187, %13 : vector<2x128xf32>
    %189 = vector.extract_strided_slice %188 {offsets = [0, 0], sizes = [2, 96], strides = [1, 1]} : vector<2x128xf32> to vector<2x96xf32>
    %190 = arith.negf %189 : vector<2x96xf32>
    %191 = math.exp %190 : vector<2x96xf32>
    %cst_56 = arith.constant 1.000000e+00 : f32
    %192 = vector.broadcast %cst_56 : f32 to vector<2x96xf32>
    %193 = arith.addf %192, %191 : vector<2x96xf32>
    %194 = arith.divf %192, %193 : vector<2x96xf32>
    %195 = vector.extract_strided_slice %194 {offsets = [0, 0], sizes = [2, 32], strides = [1, 1]} : vector<2x96xf32> to vector<2x32xf32>
    %196 = vector.extract_strided_slice %194 {offsets = [0, 32], sizes = [2, 32], strides = [1, 1]} : vector<2x96xf32> to vector<2x32xf32>
    %197 = vector.extract_strided_slice %194 {offsets = [0, 64], sizes = [2, 32], strides = [1, 1]} : vector<2x96xf32> to vector<2x32xf32>
    %198 = vector.extract_strided_slice %188 {offsets = [0, 96], sizes = [2, 32], strides = [1, 1]} : vector<2x128xf32> to vector<2x32xf32>
    %199 = math.tanh %198 : vector<2x32xf32>
    %200 = arith.mulf %196, %156 : vector<2x32xf32>
    %201 = arith.mulf %195, %199 : vector<2x32xf32>
    %202 = arith.addf %200, %201 : vector<2x32xf32>
    %203 = math.tanh %202 : vector<2x32xf32>
    %204 = arith.mulf %197, %203 : vector<2x32xf32>
    %c6 = arith.constant 6 : index
    %c0_57 = arith.constant 0 : index
    %205 = vector.load %arg16[%c6, %c0_57] : memref<16x32xf32, #tpu.memory_space<vmem>>, vector<2x32xf32>
    tpu.vector_store %arg16[%c6, %c0_57], %204 {strides = array<i32>} : memref<16x32xf32, #tpu.memory_space<vmem>>, vector<2x32xf32>,
    %c4_58 = arith.constant 4 : index
    %c0_59 = arith.constant 0 : index
    %c0_60 = arith.constant 0 : index
    %206 = vector.load %arg1[%c4_58, %c0_59, %c0_60] : memref<8x2x128xbf16, #tpu.memory_space<vmem>>, vector<1x2x128xbf16>
    %207 = vector.shape_cast %206 : vector<1x2x128xbf16> to vector<2x128xbf16>
    %208 = arith.extf %207 : vector<2x128xbf16> to vector<2x128xf32>
    %209 = arith.addf %208, %6 : vector<2x128xf32>
    %210 = arith.truncf %182 : vector<2x32xf32> to vector<2x32xbf16>
    %cst_61 = arith.constant dense<0.000000e+00> : vector<2x128xf32>
    %211 = tpu.matmul %210, %3, %cst_61 {dimension_numbers = #tpu.dot_dimension_numbers<[1], [0], [0], [1], [0, 0, 1, 1], [], []>} : vector<2x32xbf16>, vector<32x128xbf16>, vector<2x128xf32> -> vector<2x128xf32>
    %212 = arith.addf %209, %211 : vector<2x128xf32>
    %213 = vector.extract_strided_slice %212 {offsets = [0, 0], sizes = [2, 96], strides = [1, 1]} : vector<2x128xf32> to vector<2x96xf32>
    %214 = arith.negf %213 : vector<2x96xf32>
    %215 = math.exp %214 : vector<2x96xf32>
    %cst_62 = arith.constant 1.000000e+00 : f32
    %216 = vector.broadcast %cst_62 : f32 to vector<2x96xf32>
    %217 = arith.addf %216, %215 : vector<2x96xf32>
    %218 = arith.divf %216, %217 : vector<2x96xf32>
    %219 = vector.extract_strided_slice %218 {offsets = [0, 0], sizes = [2, 32], strides = [1, 1]} : vector<2x96xf32> to vector<2x32xf32>
    %220 = vector.extract_strided_slice %218 {offsets = [0, 32], sizes = [2, 32], strides = [1, 1]} : vector<2x96xf32> to vector<2x32xf32>
    %221 = vector.extract_strided_slice %218 {offsets = [0, 64], sizes = [2, 32], strides = [1, 1]} : vector<2x96xf32> to vector<2x32xf32>
    %222 = vector.extract_strided_slice %212 {offsets = [0, 96], sizes = [2, 32], strides = [1, 1]} : vector<2x128xf32> to vector<2x32xf32>
    %223 = math.tanh %222 : vector<2x32xf32>
    %224 = arith.mulf %220, %180 : vector<2x32xf32>
    %225 = arith.mulf %219, %223 : vector<2x32xf32>
    %226 = arith.addf %224, %225 : vector<2x32xf32>
    %227 = math.tanh %226 : vector<2x32xf32>
    %228 = arith.mulf %221, %227 : vector<2x32xf32>
    %229 = arith.truncf %228 : vector<2x32xf32> to vector<2x32xbf16>
    %cst_63 = arith.constant dense<0.000000e+00> : vector<2x128xf32>
    %230 = tpu.matmul %229, %8, %cst_63 {dimension_numbers = #tpu.dot_dimension_numbers<[1], [0], [0], [1], [0, 0, 1, 1], [], []>} : vector<2x32xbf16>, vector<32x128xbf16>, vector<2x128xf32> -> vector<2x128xf32>
    %231 = arith.truncf %204 : vector<2x32xf32> to vector<2x32xbf16>
    %cst_64 = arith.constant dense<0.000000e+00> : vector<2x128xf32>
    %232 = tpu.matmul %231, %10, %cst_64 {dimension_numbers = #tpu.dot_dimension_numbers<[1], [0], [0], [1], [0, 0, 1, 1], [], []>} : vector<2x32xbf16>, vector<32x128xbf16>, vector<2x128xf32> -> vector<2x128xf32>
    %233 = arith.addf %230, %232 : vector<2x128xf32>
    %234 = arith.addf %233, %13 : vector<2x128xf32>
    %235 = vector.extract_strided_slice %234 {offsets = [0, 0], sizes = [2, 96], strides = [1, 1]} : vector<2x128xf32> to vector<2x96xf32>
    %236 = arith.negf %235 : vector<2x96xf32>
    %237 = math.exp %236 : vector<2x96xf32>
    %cst_65 = arith.constant 1.000000e+00 : f32
    %238 = vector.broadcast %cst_65 : f32 to vector<2x96xf32>
    %239 = arith.addf %238, %237 : vector<2x96xf32>
    %240 = arith.divf %238, %239 : vector<2x96xf32>
    %241 = vector.extract_strided_slice %240 {offsets = [0, 0], sizes = [2, 32], strides = [1, 1]} : vector<2x96xf32> to vector<2x32xf32>
    %242 = vector.extract_strided_slice %240 {offsets = [0, 32], sizes = [2, 32], strides = [1, 1]} : vector<2x96xf32> to vector<2x32xf32>
    %243 = vector.extract_strided_slice %240 {offsets = [0, 64], sizes = [2, 32], strides = [1, 1]} : vector<2x96xf32> to vector<2x32xf32>
    %244 = vector.extract_strided_slice %234 {offsets = [0, 96], sizes = [2, 32], strides = [1, 1]} : vector<2x128xf32> to vector<2x32xf32>
    %245 = math.tanh %244 : vector<2x32xf32>
    %246 = arith.mulf %242, %202 : vector<2x32xf32>
    %247 = arith.mulf %241, %245 : vector<2x32xf32>
    %248 = arith.addf %246, %247 : vector<2x32xf32>
    %249 = math.tanh %248 : vector<2x32xf32>
    %250 = arith.mulf %243, %249 : vector<2x32xf32>
    %c8 = arith.constant 8 : index
    %c0_66 = arith.constant 0 : index
    %251 = vector.load %arg16[%c8, %c0_66] : memref<16x32xf32, #tpu.memory_space<vmem>>, vector<2x32xf32>
    tpu.vector_store %arg16[%c8, %c0_66], %250 {strides = array<i32>} : memref<16x32xf32, #tpu.memory_space<vmem>>, vector<2x32xf32>,
    %c5 = arith.constant 5 : index
    %c0_67 = arith.constant 0 : index
    %c0_68 = arith.constant 0 : index
    %252 = vector.load %arg1[%c5, %c0_67, %c0_68] : memref<8x2x128xbf16, #tpu.memory_space<vmem>>, vector<1x2x128xbf16>
    %253 = vector.shape_cast %252 : vector<1x2x128xbf16> to vector<2x128xbf16>
    %254 = arith.extf %253 : vector<2x128xbf16> to vector<2x128xf32>
    %255 = arith.addf %254, %6 : vector<2x128xf32>
    %256 = arith.truncf %228 : vector<2x32xf32> to vector<2x32xbf16>
    %cst_69 = arith.constant dense<0.000000e+00> : vector<2x128xf32>
    %257 = tpu.matmul %256, %3, %cst_69 {dimension_numbers = #tpu.dot_dimension_numbers<[1], [0], [0], [1], [0, 0, 1, 1], [], []>} : vector<2x32xbf16>, vector<32x128xbf16>, vector<2x128xf32> -> vector<2x128xf32>
    %258 = arith.addf %255, %257 : vector<2x128xf32>
    %259 = vector.extract_strided_slice %258 {offsets = [0, 0], sizes = [2, 96], strides = [1, 1]} : vector<2x128xf32> to vector<2x96xf32>
    %260 = arith.negf %259 : vector<2x96xf32>
    %261 = math.exp %260 : vector<2x96xf32>
    %cst_70 = arith.constant 1.000000e+00 : f32
    %262 = vector.broadcast %cst_70 : f32 to vector<2x96xf32>
    %263 = arith.addf %262, %261 : vector<2x96xf32>
    %264 = arith.divf %262, %263 : vector<2x96xf32>
    %265 = vector.extract_strided_slice %264 {offsets = [0, 0], sizes = [2, 32], strides = [1, 1]} : vector<2x96xf32> to vector<2x32xf32>
    %266 = vector.extract_strided_slice %264 {offsets = [0, 32], sizes = [2, 32], strides = [1, 1]} : vector<2x96xf32> to vector<2x32xf32>
    %267 = vector.extract_strided_slice %264 {offsets = [0, 64], sizes = [2, 32], strides = [1, 1]} : vector<2x96xf32> to vector<2x32xf32>
    %268 = vector.extract_strided_slice %258 {offsets = [0, 96], sizes = [2, 32], strides = [1, 1]} : vector<2x128xf32> to vector<2x32xf32>
    %269 = math.tanh %268 : vector<2x32xf32>
    %270 = arith.mulf %266, %226 : vector<2x32xf32>
    %271 = arith.mulf %265, %269 : vector<2x32xf32>
    %272 = arith.addf %270, %271 : vector<2x32xf32>
    %273 = math.tanh %272 : vector<2x32xf32>
    %274 = arith.mulf %267, %273 : vector<2x32xf32>
    %275 = arith.truncf %274 : vector<2x32xf32> to vector<2x32xbf16>
    %cst_71 = arith.constant dense<0.000000e+00> : vector<2x128xf32>
    %276 = tpu.matmul %275, %8, %cst_71 {dimension_numbers = #tpu.dot_dimension_numbers<[1], [0], [0], [1], [0, 0, 1, 1], [], []>} : vector<2x32xbf16>, vector<32x128xbf16>, vector<2x128xf32> -> vector<2x128xf32>
    %277 = arith.truncf %250 : vector<2x32xf32> to vector<2x32xbf16>
    %cst_72 = arith.constant dense<0.000000e+00> : vector<2x128xf32>
    %278 = tpu.matmul %277, %10, %cst_72 {dimension_numbers = #tpu.dot_dimension_numbers<[1], [0], [0], [1], [0, 0, 1, 1], [], []>} : vector<2x32xbf16>, vector<32x128xbf16>, vector<2x128xf32> -> vector<2x128xf32>
    %279 = arith.addf %276, %278 : vector<2x128xf32>
    %280 = arith.addf %279, %13 : vector<2x128xf32>
    %281 = vector.extract_strided_slice %280 {offsets = [0, 0], sizes = [2, 96], strides = [1, 1]} : vector<2x128xf32> to vector<2x96xf32>
    %282 = arith.negf %281 : vector<2x96xf32>
    %283 = math.exp %282 : vector<2x96xf32>
    %cst_73 = arith.constant 1.000000e+00 : f32
    %284 = vector.broadcast %cst_73 : f32 to vector<2x96xf32>
    %285 = arith.addf %284, %283 : vector<2x96xf32>
    %286 = arith.divf %284, %285 : vector<2x96xf32>
    %287 = vector.extract_strided_slice %286 {offsets = [0, 0], sizes = [2, 32], strides = [1, 1]} : vector<2x96xf32> to vector<2x32xf32>
    %288 = vector.extract_strided_slice %286 {offsets = [0, 32], sizes = [2, 32], strides = [1, 1]} : vector<2x96xf32> to vector<2x32xf32>
    %289 = vector.extract_strided_slice %286 {offsets = [0, 64], sizes = [2, 32], strides = [1, 1]} : vector<2x96xf32> to vector<2x32xf32>
    %290 = vector.extract_strided_slice %280 {offsets = [0, 96], sizes = [2, 32], strides = [1, 1]} : vector<2x128xf32> to vector<2x32xf32>
    %291 = math.tanh %290 : vector<2x32xf32>
    %292 = arith.mulf %288, %248 : vector<2x32xf32>
    %293 = arith.mulf %287, %291 : vector<2x32xf32>
    %294 = arith.addf %292, %293 : vector<2x32xf32>
    %295 = math.tanh %294 : vector<2x32xf32>
    %296 = arith.mulf %289, %295 : vector<2x32xf32>
    %c10 = arith.constant 10 : index
    %c0_74 = arith.constant 0 : index
    %297 = vector.load %arg16[%c10, %c0_74] : memref<16x32xf32, #tpu.memory_space<vmem>>, vector<2x32xf32>
    tpu.vector_store %arg16[%c10, %c0_74], %296 {strides = array<i32>} : memref<16x32xf32, #tpu.memory_space<vmem>>, vector<2x32xf32>,
    %c6_75 = arith.constant 6 : index
    %c0_76 = arith.constant 0 : index
    %c0_77 = arith.constant 0 : index
    %298 = vector.load %arg1[%c6_75, %c0_76, %c0_77] : memref<8x2x128xbf16, #tpu.memory_space<vmem>>, vector<1x2x128xbf16>
    %299 = vector.shape_cast %298 : vector<1x2x128xbf16> to vector<2x128xbf16>
    %300 = arith.extf %299 : vector<2x128xbf16> to vector<2x128xf32>
    %301 = arith.addf %300, %6 : vector<2x128xf32>
    %302 = arith.truncf %274 : vector<2x32xf32> to vector<2x32xbf16>
    %cst_78 = arith.constant dense<0.000000e+00> : vector<2x128xf32>
    %303 = tpu.matmul %302, %3, %cst_78 {dimension_numbers = #tpu.dot_dimension_numbers<[1], [0], [0], [1], [0, 0, 1, 1], [], []>} : vector<2x32xbf16>, vector<32x128xbf16>, vector<2x128xf32> -> vector<2x128xf32>
    %304 = arith.addf %301, %303 : vector<2x128xf32>
    %305 = vector.extract_strided_slice %304 {offsets = [0, 0], sizes = [2, 96], strides = [1, 1]} : vector<2x128xf32> to vector<2x96xf32>
    %306 = arith.negf %305 : vector<2x96xf32>
    %307 = math.exp %306 : vector<2x96xf32>
    %cst_79 = arith.constant 1.000000e+00 : f32
    %308 = vector.broadcast %cst_79 : f32 to vector<2x96xf32>
    %309 = arith.addf %308, %307 : vector<2x96xf32>
    %310 = arith.divf %308, %309 : vector<2x96xf32>
    %311 = vector.extract_strided_slice %310 {offsets = [0, 0], sizes = [2, 32], strides = [1, 1]} : vector<2x96xf32> to vector<2x32xf32>
    %312 = vector.extract_strided_slice %310 {offsets = [0, 32], sizes = [2, 32], strides = [1, 1]} : vector<2x96xf32> to vector<2x32xf32>
    %313 = vector.extract_strided_slice %310 {offsets = [0, 64], sizes = [2, 32], strides = [1, 1]} : vector<2x96xf32> to vector<2x32xf32>
    %314 = vector.extract_strided_slice %304 {offsets = [0, 96], sizes = [2, 32], strides = [1, 1]} : vector<2x128xf32> to vector<2x32xf32>
    %315 = math.tanh %314 : vector<2x32xf32>
    %316 = arith.mulf %312, %272 : vector<2x32xf32>
    %317 = arith.mulf %311, %315 : vector<2x32xf32>
    %318 = arith.addf %316, %317 : vector<2x32xf32>
    %319 = math.tanh %318 : vector<2x32xf32>
    %320 = arith.mulf %313, %319 : vector<2x32xf32>
    %321 = arith.truncf %320 : vector<2x32xf32> to vector<2x32xbf16>
    %cst_80 = arith.constant dense<0.000000e+00> : vector<2x128xf32>
    %322 = tpu.matmul %321, %8, %cst_80 {dimension_numbers = #tpu.dot_dimension_numbers<[1], [0], [0], [1], [0, 0, 1, 1], [], []>} : vector<2x32xbf16>, vector<32x128xbf16>, vector<2x128xf32> -> vector<2x128xf32>
    %323 = arith.truncf %296 : vector<2x32xf32> to vector<2x32xbf16>
    %cst_81 = arith.constant dense<0.000000e+00> : vector<2x128xf32>
    %324 = tpu.matmul %323, %10, %cst_81 {dimension_numbers = #tpu.dot_dimension_numbers<[1], [0], [0], [1], [0, 0, 1, 1], [], []>} : vector<2x32xbf16>, vector<32x128xbf16>, vector<2x128xf32> -> vector<2x128xf32>
    %325 = arith.addf %322, %324 : vector<2x128xf32>
    %326 = arith.addf %325, %13 : vector<2x128xf32>
    %327 = vector.extract_strided_slice %326 {offsets = [0, 0], sizes = [2, 96], strides = [1, 1]} : vector<2x128xf32> to vector<2x96xf32>
    %328 = arith.negf %327 : vector<2x96xf32>
    %329 = math.exp %328 : vector<2x96xf32>
    %cst_82 = arith.constant 1.000000e+00 : f32
    %330 = vector.broadcast %cst_82 : f32 to vector<2x96xf32>
    %331 = arith.addf %330, %329 : vector<2x96xf32>
    %332 = arith.divf %330, %331 : vector<2x96xf32>
    %333 = vector.extract_strided_slice %332 {offsets = [0, 0], sizes = [2, 32], strides = [1, 1]} : vector<2x96xf32> to vector<2x32xf32>
    %334 = vector.extract_strided_slice %332 {offsets = [0, 32], sizes = [2, 32], strides = [1, 1]} : vector<2x96xf32> to vector<2x32xf32>
    %335 = vector.extract_strided_slice %332 {offsets = [0, 64], sizes = [2, 32], strides = [1, 1]} : vector<2x96xf32> to vector<2x32xf32>
    %336 = vector.extract_strided_slice %326 {offsets = [0, 96], sizes = [2, 32], strides = [1, 1]} : vector<2x128xf32> to vector<2x32xf32>
    %337 = math.tanh %336 : vector<2x32xf32>
    %338 = arith.mulf %334, %294 : vector<2x32xf32>
    %339 = arith.mulf %333, %337 : vector<2x32xf32>
    %340 = arith.addf %338, %339 : vector<2x32xf32>
    %341 = math.tanh %340 : vector<2x32xf32>
    %342 = arith.mulf %335, %341 : vector<2x32xf32>
    %c12 = arith.constant 12 : index
    %c0_83 = arith.constant 0 : index
    %343 = vector.load %arg16[%c12, %c0_83] : memref<16x32xf32, #tpu.memory_space<vmem>>, vector<2x32xf32>
    tpu.vector_store %arg16[%c12, %c0_83], %342 {strides = array<i32>} : memref<16x32xf32, #tpu.memory_space<vmem>>, vector<2x32xf32>,
    %c7 = arith.constant 7 : index
    %c0_84 = arith.constant 0 : index
    %c0_85 = arith.constant 0 : index
    %344 = vector.load %arg1[%c7, %c0_84, %c0_85] : memref<8x2x128xbf16, #tpu.memory_space<vmem>>, vector<1x2x128xbf16>
    %345 = vector.shape_cast %344 : vector<1x2x128xbf16> to vector<2x128xbf16>
    %346 = arith.extf %345 : vector<2x128xbf16> to vector<2x128xf32>
    %347 = arith.addf %346, %6 : vector<2x128xf32>
    %348 = arith.truncf %320 : vector<2x32xf32> to vector<2x32xbf16>
    %cst_86 = arith.constant dense<0.000000e+00> : vector<2x128xf32>
    %349 = tpu.matmul %348, %3, %cst_86 {dimension_numbers = #tpu.dot_dimension_numbers<[1], [0], [0], [1], [0, 0, 1, 1], [], []>} : vector<2x32xbf16>, vector<32x128xbf16>, vector<2x128xf32> -> vector<2x128xf32>
    %350 = arith.addf %347, %349 : vector<2x128xf32>
    %351 = vector.extract_strided_slice %350 {offsets = [0, 0], sizes = [2, 96], strides = [1, 1]} : vector<2x128xf32> to vector<2x96xf32>
    %352 = arith.negf %351 : vector<2x96xf32>
    %353 = math.exp %352 : vector<2x96xf32>
    %cst_87 = arith.constant 1.000000e+00 : f32
    %354 = vector.broadcast %cst_87 : f32 to vector<2x96xf32>
    %355 = arith.addf %354, %353 : vector<2x96xf32>
    %356 = arith.divf %354, %355 : vector<2x96xf32>
    %357 = vector.extract_strided_slice %356 {offsets = [0, 0], sizes = [2, 32], strides = [1, 1]} : vector<2x96xf32> to vector<2x32xf32>
    %358 = vector.extract_strided_slice %356 {offsets = [0, 32], sizes = [2, 32], strides = [1, 1]} : vector<2x96xf32> to vector<2x32xf32>
    %359 = vector.extract_strided_slice %356 {offsets = [0, 64], sizes = [2, 32], strides = [1, 1]} : vector<2x96xf32> to vector<2x32xf32>
    %360 = vector.extract_strided_slice %350 {offsets = [0, 96], sizes = [2, 32], strides = [1, 1]} : vector<2x128xf32> to vector<2x32xf32>
    %361 = math.tanh %360 : vector<2x32xf32>
    %362 = arith.mulf %358, %318 : vector<2x32xf32>
    %363 = arith.mulf %357, %361 : vector<2x32xf32>
    %364 = arith.addf %362, %363 : vector<2x32xf32>
    %365 = math.tanh %364 : vector<2x32xf32>
    %366 = arith.mulf %359, %365 : vector<2x32xf32>
    %367 = arith.truncf %366 : vector<2x32xf32> to vector<2x32xbf16>
    %cst_88 = arith.constant dense<0.000000e+00> : vector<2x128xf32>
    %368 = tpu.matmul %367, %8, %cst_88 {dimension_numbers = #tpu.dot_dimension_numbers<[1], [0], [0], [1], [0, 0, 1, 1], [], []>} : vector<2x32xbf16>, vector<32x128xbf16>, vector<2x128xf32> -> vector<2x128xf32>
    %369 = arith.truncf %342 : vector<2x32xf32> to vector<2x32xbf16>
    %cst_89 = arith.constant dense<0.000000e+00> : vector<2x128xf32>
    %370 = tpu.matmul %369, %10, %cst_89 {dimension_numbers = #tpu.dot_dimension_numbers<[1], [0], [0], [1], [0, 0, 1, 1], [], []>} : vector<2x32xbf16>, vector<32x128xbf16>, vector<2x128xf32> -> vector<2x128xf32>
    %371 = arith.addf %368, %370 : vector<2x128xf32>
    %372 = arith.addf %371, %13 : vector<2x128xf32>
    %373 = vector.extract_strided_slice %372 {offsets = [0, 0], sizes = [2, 96], strides = [1, 1]} : vector<2x128xf32> to vector<2x96xf32>
    %374 = arith.negf %373 : vector<2x96xf32>
    %375 = math.exp %374 : vector<2x96xf32>
    %cst_90 = arith.constant 1.000000e+00 : f32
    %376 = vector.broadcast %cst_90 : f32 to vector<2x96xf32>
    %377 = arith.addf %376, %375 : vector<2x96xf32>
    %378 = arith.divf %376, %377 : vector<2x96xf32>
    %379 = vector.extract_strided_slice %378 {offsets = [0, 0], sizes = [2, 32], strides = [1, 1]} : vector<2x96xf32> to vector<2x32xf32>
    %380 = vector.extract_strided_slice %378 {offsets = [0, 32], sizes = [2, 32], strides = [1, 1]} : vector<2x96xf32> to vector<2x32xf32>
    %381 = vector.extract_strided_slice %378 {offsets = [0, 64], sizes = [2, 32], strides = [1, 1]} : vector<2x96xf32> to vector<2x32xf32>
    %382 = vector.extract_strided_slice %372 {offsets = [0, 96], sizes = [2, 32], strides = [1, 1]} : vector<2x128xf32> to vector<2x32xf32>
    %383 = math.tanh %382 : vector<2x32xf32>
    %384 = arith.mulf %380, %340 : vector<2x32xf32>
    %385 = arith.mulf %379, %383 : vector<2x32xf32>
    %386 = arith.addf %384, %385 : vector<2x32xf32>
    %387 = math.tanh %386 : vector<2x32xf32>
    %388 = arith.mulf %381, %387 : vector<2x32xf32>
    %c14 = arith.constant 14 : index
    %c0_91 = arith.constant 0 : index
    %389 = vector.load %arg16[%c14, %c0_91] : memref<16x32xf32, #tpu.memory_space<vmem>>, vector<2x32xf32>
    tpu.vector_store %arg16[%c14, %c0_91], %388 {strides = array<i32>} : memref<16x32xf32, #tpu.memory_space<vmem>>, vector<2x32xf32>,
    %c0_92 = arith.constant 0 : index
    %c0_93 = arith.constant 0 : index
    %c0_94 = arith.constant 0 : index
    %390 = vector.load %arg14[%c0_92, %c0_93, %c0_94] : memref<2x2x32xf32, #tpu.memory_space<vmem>>, vector<1x2x32xf32>
    %391 = vector.shape_cast %390 : vector<1x2x32xf32> to vector<2x32xf32>
    %392 = vector.shape_cast %366 : vector<2x32xf32> to vector<1x2x32xf32>
    tpu.vector_store %arg14[%c0_92, %c0_93, %c0_94], %392 {strides = array<i32>} : memref<2x2x32xf32, #tpu.memory_space<vmem>>, vector<1x2x32xf32>,
    %c0_95 = arith.constant 0 : index
    %c0_96 = arith.constant 0 : index
    %c0_97 = arith.constant 0 : index
    %393 = vector.load %arg15[%c0_95, %c0_96, %c0_97] : memref<2x2x32xf32, #tpu.memory_space<vmem>>, vector<1x2x32xf32>
    %394 = vector.shape_cast %393 : vector<1x2x32xf32> to vector<2x32xf32>
    %395 = vector.shape_cast %364 : vector<2x32xf32> to vector<1x2x32xf32>
    tpu.vector_store %arg15[%c0_95, %c0_96, %c0_97], %395 {strides = array<i32>} : memref<2x2x32xf32, #tpu.memory_space<vmem>>, vector<1x2x32xf32>,
    %c1_98 = arith.constant 1 : index
    %c0_99 = arith.constant 0 : index
    %c0_100 = arith.constant 0 : index
    %396 = vector.load %arg14[%c1_98, %c0_99, %c0_100] : memref<2x2x32xf32, #tpu.memory_space<vmem>>, vector<1x2x32xf32>
    %397 = vector.shape_cast %396 : vector<1x2x32xf32> to vector<2x32xf32>
    %398 = vector.shape_cast %388 : vector<2x32xf32> to vector<1x2x32xf32>
    tpu.vector_store %arg14[%c1_98, %c0_99, %c0_100], %398 {strides = array<i32>} : memref<2x2x32xf32, #tpu.memory_space<vmem>>, vector<1x2x32xf32>,
    %c1_101 = arith.constant 1 : index
    %c0_102 = arith.constant 0 : index
    %c0_103 = arith.constant 0 : index
    %399 = vector.load %arg15[%c1_101, %c0_102, %c0_103] : memref<2x2x32xf32, #tpu.memory_space<vmem>>, vector<1x2x32xf32>
    %400 = vector.shape_cast %399 : vector<1x2x32xf32> to vector<2x32xf32>
    %401 = vector.shape_cast %386 : vector<2x32xf32> to vector<1x2x32xf32>
    tpu.vector_store %arg15[%c1_101, %c0_102, %c0_103], %401 {strides = array<i32>} : memref<2x2x32xf32, #tpu.memory_space<vmem>>, vector<1x2x32xf32>,
    %c0_104 = arith.constant 0 : index
    %c0_105 = arith.constant 0 : index
    %402 = vector.load %arg16[%c0_104, %c0_105] : memref<16x32xf32, #tpu.memory_space<vmem>>, vector<16x32xf32>
    %403 = arith.truncf %402 : vector<16x32xf32> to vector<16x32xbf16>
    %c0_106 = arith.constant 0 : index
    %c0_107 = arith.constant 0 : index
    %404 = vector.load %arg9[%c0_106, %c0_107] : memref<32x32xbf16, #tpu.memory_space<vmem>>, vector<32x32xbf16>
    %cst_108 = arith.constant dense<0.000000e+00> : vector<16x32xf32>
    %405 = tpu.matmul %403, %404, %cst_108 {dimension_numbers = #tpu.dot_dimension_numbers<[1], [0], [0], [1], [0, 0, 1, 1], [], []>} : vector<16x32xbf16>, vector<32x32xbf16>, vector<16x32xf32> -> vector<16x32xf32>
    %c0_109 = arith.constant 0 : index
    %c0_110 = arith.constant 0 : index
    %406 = vector.load %arg10[%c0_109, %c0_110] : memref<1x32xf32, #tpu.memory_space<vmem>>, vector<1x32xf32>
    %407 = vector.broadcast %406 : vector<1x32xf32> to vector<16x32xf32>
    %408 = arith.addf %405, %407 : vector<16x32xf32>
    %cst_111 = arith.constant 0.000000e+00 : f32
    %409 = vector.broadcast %cst_111 : f32 to vector<16x32xf32>
    %410 = arith.maximumf %408, %409 : vector<16x32xf32>
    %411 = arith.truncf %410 : vector<16x32xf32> to vector<16x32xbf16>
    %c0_112 = arith.constant 0 : index
    %c0_113 = arith.constant 0 : index
    %412 = vector.load %arg11[%c0_112, %c0_113] : memref<32x128xbf16, #tpu.memory_space<vmem>>, vector<32x128xbf16>
    %cst_114 = arith.constant dense<0.000000e+00> : vector<16x128xf32>
    %413 = tpu.matmul %411, %412, %cst_114 {dimension_numbers = #tpu.dot_dimension_numbers<[1], [0], [0], [1], [0, 0, 1, 1], [], []>} : vector<16x32xbf16>, vector<32x128xbf16>, vector<16x128xf32> -> vector<16x128xf32>
    %c0_115 = arith.constant 0 : index
    %c0_116 = arith.constant 0 : index
    %414 = vector.load %arg12[%c0_115, %c0_116] : memref<1x128xf32, #tpu.memory_space<vmem>>, vector<1x128xf32>
    %415 = vector.broadcast %414 : vector<1x128xf32> to vector<16x128xf32>
    %416 = arith.addf %413, %415 : vector<16x128xf32>
    %c0_117 = arith.constant 0 : index
    %c0_118 = arith.constant 0 : index
    %417 = vector.load %arg13[%c0_117, %c0_118] : memref<16x128xf32, #tpu.memory_space<vmem>>, vector<16x128xf32>
    tpu.vector_store %arg13[%c0_117, %c0_118], %416 {strides = array<i32>} : memref<16x128xf32, #tpu.memory_space<vmem>>, vector<16x128xf32>,
    return
  }
  func.func @transform_0(%arg0: i32) -> (i32, i32, i32) {
    %c0_i32 = arith.constant 0 : i32
    %c0_i32_0 = arith.constant 0 : i32
    %c0_i32_1 = arith.constant 0 : i32
    return %arg0, %c0_i32, %c0_i32_0 : i32, i32, i32
  }
  func.func @transform_1(%arg0: i32) -> (i32, i32) {
    %c0_i32 = arith.constant 0 : i32
    %c0_i32_0 = arith.constant 0 : i32
    %c0_i32_1 = arith.constant 0 : i32
    return %c0_i32, %c0_i32_0 : i32, i32
  }
  func.func @transform_2(%arg0: i32) -> (i32, i32) {
    %c0_i32 = arith.constant 0 : i32
    %c0_i32_0 = arith.constant 0 : i32
    %c0_i32_1 = arith.constant 0 : i32
    return %c0_i32, %c0_i32_0 : i32, i32
  }
  func.func @transform_3(%arg0: i32) -> (i32, i32, i32) {
    %c0_i32 = arith.constant 0 : i32
    %c0_i32_0 = arith.constant 0 : i32
    %c0_i32_1 = arith.constant 0 : i32
    %c0_i32_2 = arith.constant 0 : i32
    return %c0_i32, %c0_i32_0, %c0_i32_1 : i32, i32, i32
  }
  func.func @transform_4(%arg0: i32) -> (i32, i32, i32) {
    %c0_i32 = arith.constant 0 : i32
    %c0_i32_0 = arith.constant 0 : i32
    %c0_i32_1 = arith.constant 0 : i32
    %c0_i32_2 = arith.constant 0 : i32
    return %c0_i32, %c0_i32_0, %c0_i32_1 : i32, i32, i32
  }
  func.func @transform_5(%arg0: i32) -> (i32, i32) {
    %c0_i32 = arith.constant 0 : i32
    %c0_i32_0 = arith.constant 0 : i32
    %c0_i32_1 = arith.constant 0 : i32
    return %c0_i32, %c0_i32_0 : i32, i32
  }
  func.func @transform_6(%arg0: i32) -> (i32, i32, i32) {
    %c0_i32 = arith.constant 0 : i32
    %c0_i32_0 = arith.constant 0 : i32
    %c0_i32_1 = arith.constant 0 : i32
    %c0_i32_2 = arith.constant 0 : i32
    return %c0_i32, %c0_i32_0, %c0_i32_1 : i32, i32, i32
  }
  func.func @transform_7(%arg0: i32) -> (i32, i32, i32) {
    %c0_i32 = arith.constant 0 : i32
    %c0_i32_0 = arith.constant 0 : i32
    %c0_i32_1 = arith.constant 0 : i32
    %c0_i32_2 = arith.constant 0 : i32
    return %c0_i32, %c0_i32_0, %c0_i32_1 : i32, i32, i32
  }
  func.func @transform_8(%arg0: i32) -> (i32, i32) {
    %c0_i32 = arith.constant 0 : i32
    %c0_i32_0 = arith.constant 0 : i32
    %c0_i32_1 = arith.constant 0 : i32
    return %c0_i32, %c0_i32_0 : i32, i32
  }
  func.func @transform_9(%arg0: i32) -> (i32, i32) {
    %c0_i32 = arith.constant 0 : i32
    %c0_i32_0 = arith.constant 0 : i32
    %c0_i32_1 = arith.constant 0 : i32
    return %c0_i32, %c0_i32_0 : i32, i32
  }
  func.func @transform_10(%arg0: i32) -> (i32, i32) {
    %c0_i32 = arith.constant 0 : i32
    %c0_i32_0 = arith.constant 0 : i32
    %c0_i32_1 = arith.constant 0 : i32
    return %c0_i32, %c0_i32_0 : i32, i32
  }
  func.func @transform_11(%arg0: i32) -> (i32, i32) {
    %c0_i32 = arith.constant 0 : i32
    %c0_i32_0 = arith.constant 0 : i32
    %c0_i32_1 = arith.constant 0 : i32
    return %c0_i32, %c0_i32_0 : i32, i32
  }
  func.func @transform_12(%arg0: i32) -> (i32, i32) {
    %c0_i32 = arith.constant 0 : i32
    %c0_i32_0 = arith.constant 0 : i32
    return %arg0, %c0_i32 : i32, i32
  }
}

</mosaic_0001>

<llo_original>
// kernel: sentence_finisher_forward.1
$region0: #{sentence_finisher_forward.1}
  #allocation0 [shape = 'u32[]', space=smem, size = 0x4, offset = 0x4, fixed_abs, tag = 'smem constant byte address 0x4 - core index']
  #allocation1 [shape = 'u32[72,128]{1,0:T(1,128)}', space=vmem, size = 0x9000, scoped, tag = 'internal scratch']
  #allocation2 [shape = 'f32[2,2,32]{2,1,0:T(2,128)}', space=vmem, size = 0x800, scoped, tag = 'scratch operand']
  #allocation3 [shape = 'f32[2,2,32]{2,1,0:T(2,128)}', space=vmem, size = 0x800, scoped, tag = 'scratch operand']
  #allocation4 [shape = 'f32[16,32]{1,0:T(8,128)}', space=vmem, size = 0x2000, scoped, tag = 'scratch operand']
  %s0 = inlined_call_operand.vmem [shape: bf16[8,2,128], index: 0, kind: input, shape index: {}]
  %s1 = inlined_call_operand.vmem [shape: f32[1,128], index: 1, kind: input, shape index: {}]
  %s2 = inlined_call_operand.vmem [shape: bf16[32,128], index: 2, kind: input, shape index: {}]
  %s3 = inlined_call_operand.vmem [shape: bf16[1,32,128], index: 3, kind: input, shape index: {}]
  %s4 = inlined_call_operand.vmem [shape: bf16[1,32,128], index: 4, kind: input, shape index: {}]
  %s5 = inlined_call_operand.vmem [shape: f32[1,128], index: 5, kind: input, shape index: {}]
  %s6 = inlined_call_operand.vmem [shape: f32[2,2,32], index: 6, kind: input, shape index: {}]
  %s7 = inlined_call_operand.vmem [shape: f32[2,2,32], index: 7, kind: input, shape index: {}]
  %s8 = inlined_call_operand.vmem [shape: bf16[32,32], index: 8, kind: input, shape index: {}]
  %s9 = inlined_call_operand.vmem [shape: f32[1,32], index: 9, kind: input, shape index: {}]
  %s10 = inlined_call_operand.vmem [shape: bf16[32,128], index: 10, kind: input, shape index: {}]
  %s11 = inlined_call_operand.vmem [shape: f32[1,128], index: 11, kind: input, shape index: {}]
  %s12 = inlined_call_operand.vmem [shape: f32[16,128], index: 12, kind: output, shape index: {}]
  %s13 = sld [smem:[#allocation0]]
  $region62: #{sentence_finisher_forward.1} parent=0
    _
  %s15 = ssub.s32 1, %s13
  %s16 = scalar_select 0, %s15, %s13
  // Predicated region
  $region2: #{sentence_finisher_forward.1} parent=0 // pred_check
    _
  $region3: #{sentence_finisher_forward.1} parent=0 // pred_check_branch
    %18 = sbr.rel (0) target = $region5
  $region4: #{sentence_finisher_forward.1} parent=0 // pred_region
    _
  $region5: #{sentence_finisher_forward.1} parent=0 // pred_fallthru
    _
  // Predicated region
  $region6: #{sentence_finisher_forward.1} parent=0 // pred_check
    _
  $region7: #{sentence_finisher_forward.1} parent=0 // pred_check_branch
    %20 = sbr.rel (0) target = $region9
  $region8: #{sentence_finisher_forward.1} parent=0 // pred_region
    _
  $region9: #{sentence_finisher_forward.1} parent=0 // pred_fallthru
    _
  // Predicated region
  $region10: #{sentence_finisher_forward.1} parent=0 // pred_check
    _
  $region11: #{sentence_finisher_forward.1} parent=0 // pred_check_branch
    %22 = sbr.rel (0) target = $region13
  $region12: #{sentence_finisher_forward.1} parent=0 // pred_region
    _
  $region13: #{sentence_finisher_forward.1} parent=0 // pred_fallthru
    _
  // Predicated region
  $region14: #{sentence_finisher_forward.1} parent=0 // pred_check
    _
  $region15: #{sentence_finisher_forward.1} parent=0 // pred_check_branch
    %24 = sbr.rel (0) target = $region17
  $region16: #{sentence_finisher_forward.1} parent=0 // pred_region
    _
  $region17: #{sentence_finisher_forward.1} parent=0 // pred_fallthru
    _
  // Predicated region
  $region18: #{sentence_finisher_forward.1} parent=0 // pred_check
    _
  $region19: #{sentence_finisher_forward.1} parent=0 // pred_check_branch
    %26 = sbr.rel (0) target = $region21
  $region20: #{sentence_finisher_forward.1} parent=0 // pred_region
    _
  $region21: #{sentence_finisher_forward.1} parent=0 // pred_fallthru
    _
  // Predicated region
  $region22: #{sentence_finisher_forward.1} parent=0 // pred_check
    _
  $region23: #{sentence_finisher_forward.1} parent=0 // pred_check_branch
    %28 = sbr.rel (0) target = $region25
  $region24: #{sentence_finisher_forward.1} parent=0 // pred_region
    _
  $region25: #{sentence_finisher_forward.1} parent=0 // pred_fallthru
    _
  // Predicated region
  $region26: #{sentence_finisher_forward.1} parent=0 // pred_check
    _
  $region27: #{sentence_finisher_forward.1} parent=0 // pred_check_branch
    %30 = sbr.rel (0) target = $region29
  $region28: #{sentence_finisher_forward.1} parent=0 // pred_region
    _
  $region29: #{sentence_finisher_forward.1} parent=0 // pred_fallthru
    _
  // Predicated region
  $region30: #{sentence_finisher_forward.1} parent=0 // pred_check
    _
  $region31: #{sentence_finisher_forward.1} parent=0 // pred_check_branch
    %32 = sbr.rel (0) target = $region33
  $region32: #{sentence_finisher_forward.1} parent=0 // pred_region
    _
  $region33: #{sentence_finisher_forward.1} parent=0 // pred_fallthru
    _
  // Predicated region
  $region34: #{sentence_finisher_forward.1} parent=0 // pred_check
    _
  $region35: #{sentence_finisher_forward.1} parent=0 // pred_check_branch
    %34 = sbr.rel (0) target = $region37
  $region36: #{sentence_finisher_forward.1} parent=0 // pred_region
    _
  $region37: #{sentence_finisher_forward.1} parent=0 // pred_fallthru
    _
  // Predicated region
  $region38: #{sentence_finisher_forward.1} parent=0 // pred_check
    _
  $region39: #{sentence_finisher_forward.1} parent=0 // pred_check_branch
    %36 = sbr.rel (0) target = $region41
  $region40: #{sentence_finisher_forward.1} parent=0 // pred_region
    _
  $region41: #{sentence_finisher_forward.1} parent=0 // pred_fallthru
    _
  // Predicated region
  $region42: #{sentence_finisher_forward.1} parent=0 // pred_check
    _
  $region43: #{sentence_finisher_forward.1} parent=0 // pred_check_branch
    %38 = sbr.rel (0) target = $region45
  $region44: #{sentence_finisher_forward.1} parent=0 // pred_region
    _
  $region45: #{sentence_finisher_forward.1} parent=0 // pred_fallthru
    _
  // Predicated region
  $region46: #{sentence_finisher_forward.1} parent=0 // pred_check
    _
  $region47: #{sentence_finisher_forward.1} parent=0 // pred_check_branch
    %40 = sbr.rel (0) target = $region49
  $region48: #{sentence_finisher_forward.1} parent=0 // pred_region
    _
  $region49: #{sentence_finisher_forward.1} parent=0 // pred_fallthru
    _
  %p42 = scmp.eq.s32.totalorder 0, 0
  // Predicated region
  $region50: #{sentence_finisher_forward.1} parent=0 // pred_check
    %p43 = pneg %p42
  $region51: #{sentence_finisher_forward.1} parent=0 // pred_check_branch
    %45 = sbr.rel (%p43) target = $region53
  $region52: #{sentence_finisher_forward.1} parent=0 // pred_region
    %v46 = vld [vmem:[%s6] sm:$0x3]
    %v47 = vld [vmem:[%s6 + $0x2] sm:$0x3]
    %vm48 = vcmask 254976
    %49 = vst.msk [vmem:[#allocation2] sm:$0x3] %vm48, %v46
    %50 = vst.msk [vmem:[#allocation2 + $0x2] sm:$0x3] %vm48, %v47
    %v51 = vld [vmem:[%s7] sm:$0x3]
    %v52 = vld [vmem:[%s7 + $0x2] sm:$0x3]
    %53 = vst.msk [vmem:[#allocation3] sm:$0x3] %vm48, %v51
    %54 = vst.msk [vmem:[#allocation3 + $0x2] sm:$0x3] %vm48, %v52
  $region53: #{sentence_finisher_forward.1} parent=0 // pred_fallthru
    _
  %v55 = vld [vmem:[%s2] sm:$0xf]
  %v56 = vld [vmem:[%s2 + $0x4] sm:$0xf]
  %v57 = vld [vmem:[%s2 + $0x8] sm:$0xf]
  %v58 = vld [vmem:[%s2 + $0xc] sm:$0xf]
  %v59 = vld [vmem:[%s1] sm:$0x1]
  %v61 = vperm.slane %v59, 0
  %v63 = vld [vmem:[%s3] sm:$0xf]
  %v64 = vld [vmem:[%s3 + $0x4] sm:$0xf]
  %v65 = vld [vmem:[%s3 + $0x8] sm:$0xf]
  %v66 = vld [vmem:[%s3 + $0xc] sm:$0xf]
  %v67 = vld [vmem:[%s4] sm:$0xf]
  %v68 = vld [vmem:[%s4 + $0x4] sm:$0xf]
  %v69 = vld [vmem:[%s4 + $0x8] sm:$0xf]
  %v70 = vld [vmem:[%s4 + $0xc] sm:$0xf]
  %v71 = vld [vmem:[%s5] sm:$0x1]
  %v73 = vperm.slane %v71, 0
  %v75 = vld [vmem:[#allocation2] sm:$0x3]
  %s76 = scalar_lea.vmem [#allocation2], 2
  %v77 = vld [vmem:[%s76] sm:$0x3]
  %v78 = vld [vmem:[#allocation3] sm:$0x3]
  %s79 = scalar_lea.vmem [#allocation3], 2
  %v80 = vld [vmem:[%s79] sm:$0x3]
  %v81 = vld [vmem:[%s0] sm:$0x1]
  %v82 = vunpack.c.l.bf16 %v81
  %v83 = vadd.f32 %v82, %v61
  %v84 = vpack.c.bf16 %v75, %v75
  %v89 = vunpack.c.l.b16 %v55
  %v90 = vunpack.c.l.b16 %v56
  %v91 = vunpack.c.l.b16 %v57
  %v92 = vunpack.c.l.b16 %v58
  %v93 = vpack.c.b16 %v90, %v89
  %v94 = vpack.c.b16 %v92, %v91
  %vm97 = vcmask 261120
  %v99 = vsel %vm97, %v84, 0
  %101 = vmatpush.bf16.msra.mxu0 0
  %102 = vmatpush.bf16.msra.mxu0 0
  %103 = vmatpush.bf16.msra.mxu0 0
  %104 = vmatpush.bf16.msra.mxu0 0
  %105 = vmatpush.bf16.msra.mxu0 0
  %106 = vmatpush.bf16.msra.mxu0 0
  %107 = vmatpush.bf16.msra.mxu0 %v94
  %108 = vmatpush.bf16.msra.mxu0 %v93
  %109 = vmatmul.bf16.gmra.mxu0 %v99
  %v110 = vpop.f32.mrf.mxu0
  %v111 = vadd.f32 0.0, %v110
  %v112 = vpop.f32.mrf.mxu0
  %113 = vdwg.mxu0
  %v114 = vadd.f32 %v83, %v111
  %v115 = vxor.u32 %v114, 2147483648
  %v116 = vmul.f32 %v115, 1.442695
  %v117 = vpow.pop %v116
  %v118 = vadd.f32 %v117, 1.0
  %v119 = vrcp.pop %v118
  %v120 = vmul.f32 %v118, %v119
  %v121 = vsub.f32 1.0, %v120
  %v122 = vmul.f32 %v119, %v121
  %v123 = vadd.f32 %v119, %v122
  %vm124 = vweird.f32 %v118
  %vm125 = vweird.f32 %v119
  %vm126 = vmor %vm124, %vm125
  %v127 = vsel %vm126, %v119, %v123
  %v128 = vand.u32 2147483647, %v118
  %vm129 = vcmp.eq.f32.partialorder %v128, 8.507059e+37
  %v130 = vand.u32 %v118, 2147483648
  %v131 = vor.u32 1.1754944e-38, %v130
  %v132 = vsel %vm129, %v131, %v127
  %v133 = vmul.f32 1.0, %v132
  %v134 = vtanh.pop %v114
  %136 = vrot.lane.b32.xlu0 %v78, 32
  %v137 = vpop.permute.xlu0 %136
  %v139 = vmul.f32 %v133, %v137
  %141 = vrot.lane.b32.xlu0 %v134, 32
  %v142 = vpop.permute.xlu0 %141
  %v144 = vmul.f32 %v133, %v142
  %146 = vrot.lane.b32.xlu0 %v144, 32
  %v147 = vpop.permute.xlu0 %146
  %v149 = vadd.f32 %v139, %v147
  %v150 = vtanh.pop %v149
  %152 = vrot.lane.b32.xlu0 %v150, 32
  %v153 = vpop.permute.xlu0 %152
  %v155 = vmul.f32 %v133, %v153
  %v156 = vpack.c.bf16 %v155, %v155
  %v157 = vpack.c.bf16 %v77, %v77
  %v162 = vunpack.c.l.b16 %v67
  %v163 = vunpack.c.l.b16 %v68
  %v164 = vunpack.c.l.b16 %v69
  %v165 = vunpack.c.l.b16 %v70
  %v166 = vpack.c.b16 %v163, %v162
  %v167 = vpack.c.b16 %v165, %v164
  %v171 = vsel %vm97, %v157, 0
  %173 = vmatpush.bf16.msra.mxu0 0
  %174 = vmatpush.bf16.msra.mxu0 0
  %175 = vmatpush.bf16.msra.mxu0 0
  %176 = vmatpush.bf16.msra.mxu0 0
  %177 = vmatpush.bf16.msra.mxu0 0
  %178 = vmatpush.bf16.msra.mxu0 0
  %179 = vmatpush.bf16.msra.mxu0 %v167
  %180 = vmatpush.bf16.msra.mxu0 %v166
  %181 = vmatmul.bf16.gmra.mxu0 %v171
  %v182 = vpop.f32.mrf.mxu0
  %v183 = vadd.f32 0.0, %v182
  %v184 = vpop.f32.mrf.mxu0
  %185 = vdwg.mxu0
  %187 = vrot.lane.b32.xlu0 %v156, 64
  %v188 = vpop.permute.xlu0 %187
  %v193 = vunpack.c.l.b16 %v63
  %v194 = vunpack.c.l.b16 %v64
  %v195 = vunpack.c.l.b16 %v65
  %v196 = vunpack.c.l.b16 %v66
  %v197 = vpack.c.b16 %v194, %v193
  %v198 = vpack.c.b16 %v196, %v195
  %v202 = vsel %vm97, %v188, 0
  %204 = vmatpush.bf16.msra.mxu0 0
  %205 = vmatpush.bf16.msra.mxu0 0
  %206 = vmatpush.bf16.msra.mxu0 0
  %207 = vmatpush.bf16.msra.mxu0 0
  %208 = vmatpush.bf16.msra.mxu0 0
  %209 = vmatpush.bf16.msra.mxu0 0
  %210 = vmatpush.bf16.msra.mxu0 %v198
  %211 = vmatpush.bf16.msra.mxu0 %v197
  %212 = vmatmul.bf16.gmra.mxu0 %v202
  %v213 = vpop.f32.mrf.mxu0
  %v214 = vadd.f32 %v183, %v213
  %v215 = vpop.f32.mrf.mxu0
  %216 = vdwg.mxu0
  %v217 = vadd.f32 %v214, %v73
  %v218 = vxor.u32 %v217, 2147483648
  %v219 = vmul.f32 %v218, 1.442695
  %v220 = vpow.pop %v219
  %v221 = vadd.f32 %v220, 1.0
  %v222 = vrcp.pop %v221
  %v223 = vmul.f32 %v221, %v222
  %v224 = vsub.f32 1.0, %v223
  %v225 = vmul.f32 %v222, %v224
  %v226 = vadd.f32 %v222, %v225
  %vm227 = vweird.f32 %v221
  %vm228 = vweird.f32 %v222
  %vm229 = vmor %vm227, %vm228
  %v230 = vsel %vm229, %v222, %v226
  %v231 = vand.u32 2147483647, %v221
  %vm232 = vcmp.eq.f32.partialorder %v231, 8.507059e+37
  %v233 = vand.u32 %v221, 2147483648
  %v234 = vor.u32 1.1754944e-38, %v233
  %v235 = vsel %vm232, %v234, %v230
  %v236 = vmul.f32 1.0, %v235
  %v237 = vtanh.pop %v217
  %239 = vrot.lane.b32.xlu0 %v80, 32
  %v240 = vpop.permute.xlu0 %239
  %v242 = vmul.f32 %v236, %v240
  %244 = vrot.lane.b32.xlu0 %v237, 32
  %v245 = vpop.permute.xlu0 %244
  %v247 = vmul.f32 %v236, %v245
  %249 = vrot.lane.b32.xlu0 %v247, 32
  %v250 = vpop.permute.xlu0 %249
  %v252 = vadd.f32 %v242, %v250
  %v253 = vtanh.pop %v252
  %255 = vrot.lane.b32.xlu0 %v253, 32
  %v256 = vpop.permute.xlu0 %255
  %v258 = vmul.f32 %v236, %v256
  %260 = vrot.lane.b32.xlu0 %v258, 64
  %v261 = vpop.permute.xlu0 %260
  %vm263 = vcmask 254976
  %264 = vst.msk [vmem:[#allocation4] sm:$0x3] %vm263, %v261
  %s265 = scalar_lea.vmem %s0, 1
  %v266 = vld [vmem:[%s265] sm:$0x1]
  %v267 = vunpack.c.l.bf16 %v266
  %v268 = vadd.f32 %v267, %v61
  %269 = vmatpush.bf16.msra.mxu0 0
  %270 = vmatpush.bf16.msra.mxu0 0
  %271 = vmatpush.bf16.msra.mxu0 0
  %272 = vmatpush.bf16.msra.mxu0 0
  %273 = vmatpush.bf16.msra.mxu0 0
  %274 = vmatpush.bf16.msra.mxu0 0
  %275 = vmatpush.bf16.msra.mxu0 %v94
  %276 = vmatpush.bf16.msra.mxu0 %v93
  %277 = vmatmul.bf16.gmra.mxu0 %v202
  %v278 = vpop.f32.mrf.mxu0
  %v279 = vadd.f32 0.0, %v278
  %v280 = vpop.f32.mrf.mxu0
  %281 = vdwg.mxu0
  %v282 = vadd.f32 %v268, %v279
  %v283 = vxor.u32 %v282, 2147483648
  %v284 = vmul.f32 %v283, 1.442695
  %v285 = vpow.pop %v284
  %v286 = vadd.f32 %v285, 1.0
  %v287 = vrcp.pop %v286
  %v288 = vmul.f32 %v286, %v287
  %v289 = vsub.f32 1.0, %v288
  %v290 = vmul.f32 %v287, %v289
  %v291 = vadd.f32 %v287, %v290
  %vm292 = vweird.f32 %v286
  %vm293 = vweird.f32 %v287
  %vm294 = vmor %vm292, %vm293
  %v295 = vsel %vm294, %v287, %v291
  %v296 = vand.u32 2147483647, %v286
  %vm297 = vcmp.eq.f32.partialorder %v296, 8.507059e+37
  %v298 = vand.u32 %v286, 2147483648
  %v299 = vor.u32 1.1754944e-38, %v298
  %v300 = vsel %vm297, %v299, %v295
  %v301 = vmul.f32 1.0, %v300
  %v302 = vtanh.pop %v282
  %v303 = vmul.f32 %v301, %v149
  %305 = vrot.lane.b32.xlu0 %v302, 32
  %v306 = vpop.permute.xlu0 %305
  %v308 = vmul.f32 %v301, %v306
  %310 = vrot.lane.b32.xlu0 %v308, 32
  %v311 = vpop.permute.xlu0 %310
  %v313 = vadd.f32 %v303, %v311
  %v314 = vtanh.pop %v313
  %316 = vrot.lane.b32.xlu0 %v314, 32
  %v317 = vpop.permute.xlu0 %316
  %v319 = vmul.f32 %v301, %v317
  %v320 = vpack.c.bf16 %v319, %v319
  %v321 = vpack.c.bf16 %v258, %v258
  %323 = vrot.lane.b32.xlu0 %v321, 64
  %v324 = vpop.permute.xlu0 %323
  %v326 = vsel %vm97, %v324, 0
  %328 = vmatpush.bf16.msra.mxu0 0
  %329 = vmatpush.bf16.msra.mxu0 0
  %330 = vmatpush.bf16.msra.mxu0 0
  %331 = vmatpush.bf16.msra.mxu0 0
  %332 = vmatpush.bf16.msra.mxu0 0
  %333 = vmatpush.bf16.msra.mxu0 0
  %334 = vmatpush.bf16.msra.mxu0 %v167
  %335 = vmatpush.bf16.msra.mxu0 %v166
  %336 = vmatmul.bf16.gmra.mxu0 %v326
  %v337 = vpop.f32.mrf.mxu0
  %v338 = vadd.f32 0.0, %v337
  %v339 = vpop.f32.mrf.mxu0
  %340 = vdwg.mxu0
  %342 = vrot.lane.b32.xlu0 %v320, 64
  %v343 = vpop.permute.xlu0 %342
  %v345 = vsel %vm97, %v343, 0
  %347 = vmatpush.bf16.msra.mxu0 0
  %348 = vmatpush.bf16.msra.mxu0 0
  %349 = vmatpush.bf16.msra.mxu0 0
  %350 = vmatpush.bf16.msra.mxu0 0
  %351 = vmatpush.bf16.msra.mxu0 0
  %352 = vmatpush.bf16.msra.mxu0 0
  %353 = vmatpush.bf16.msra.mxu0 %v198
  %354 = vmatpush.bf16.msra.mxu0 %v197
  %355 = vmatmul.bf16.gmra.mxu0 %v345
  %v356 = vpop.f32.mrf.mxu0
  %v357 = vadd.f32 %v338, %v356
  %v358 = vpop.f32.mrf.mxu0
  %359 = vdwg.mxu0
  %v360 = vadd.f32 %v357, %v73
  %v361 = vxor.u32 %v360, 2147483648
  %v362 = vmul.f32 %v361, 1.442695
  %v363 = vpow.pop %v362
  %v364 = vadd.f32 %v363, 1.0
  %v365 = vrcp.pop %v364
  %v366 = vmul.f32 %v364, %v365
  %v367 = vsub.f32 1.0, %v366
  %v368 = vmul.f32 %v365, %v367
  %v369 = vadd.f32 %v365, %v368
  %vm370 = vweird.f32 %v364
  %vm371 = vweird.f32 %v365
  %vm372 = vmor %vm370, %vm371
  %v373 = vsel %vm372, %v365, %v369
  %v374 = vand.u32 2147483647, %v364
  %vm375 = vcmp.eq.f32.partialorder %v374, 8.507059e+37
  %v376 = vand.u32 %v364, 2147483648
  %v377 = vor.u32 1.1754944e-38, %v376
  %v378 = vsel %vm375, %v377, %v373
  %v379 = vmul.f32 1.0, %v378
  %v380 = vtanh.pop %v360
  %v381 = vmul.f32 %v379, %v252
  %383 = vrot.lane.b32.xlu0 %v380, 32
  %v384 = vpop.permute.xlu0 %383
  %v386 = vmul.f32 %v379, %v384
  %388 = vrot.lane.b32.xlu0 %v386, 32
  %v389 = vpop.permute.xlu0 %388
  %v391 = vadd.f32 %v381, %v389
  %v392 = vtanh.pop %v391
  %394 = vrot.lane.b32.xlu0 %v392, 32
  %v395 = vpop.permute.xlu0 %394
  %v397 = vmul.f32 %v379, %v395
  %399 = vrot.lane.b32.xlu0 %v397, 64
  %v400 = vpop.permute.xlu0 %399
  %402 = vst.msk [vmem:[#allocation4 + $0x2] sm:$0x3] %vm263, %v400
  %s403 = scalar_lea.vmem %s0, 2
  %v404 = vld [vmem:[%s403] sm:$0x1]
  %v405 = vunpack.c.l.bf16 %v404
  %v406 = vadd.f32 %v405, %v61
  %407 = vmatpush.bf16.msra.mxu0 0
  %408 = vmatpush.bf16.msra.mxu0 0
  %409 = vmatpush.bf16.msra.mxu0 0
  %410 = vmatpush.bf16.msra.mxu0 0
  %411 = vmatpush.bf16.msra.mxu0 0
  %412 = vmatpush.bf16.msra.mxu0 0
  %413 = vmatpush.bf16.msra.mxu0 %v94
  %414 = vmatpush.bf16.msra.mxu0 %v93
  %415 = vmatmul.bf16.gmra.mxu0 %v345
  %v416 = vpop.f32.mrf.mxu0
  %v417 = vadd.f32 0.0, %v416
  %v418 = vpop.f32.mrf.mxu0
  %419 = vdwg.mxu0
  %v420 = vadd.f32 %v406, %v417
  %v421 = vxor.u32 %v420, 2147483648
  %v422 = vmul.f32 %v421, 1.442695
  %v423 = vpow.pop %v422
  %v424 = vadd.f32 %v423, 1.0
  %v425 = vrcp.pop %v424
  %v426 = vmul.f32 %v424, %v425
  %v427 = vsub.f32 1.0, %v426
  %v428 = vmul.f32 %v425, %v427
  %v429 = vadd.f32 %v425, %v428
  %vm430 = vweird.f32 %v424
  %vm431 = vweird.f32 %v425
  %vm432 = vmor %vm430, %vm431
  %v433 = vsel %vm432, %v425, %v429
  %v434 = vand.u32 2147483647, %v424
  %vm435 = vcmp.eq.f32.partialorder %v434, 8.507059e+37
  %v436 = vand.u32 %v424, 2147483648
  %v437 = vor.u32 1.1754944e-38, %v436
  %v438 = vsel %vm435, %v437, %v433
  %v439 = vmul.f32 1.0, %v438
  %v440 = vtanh.pop %v420
  %v441 = vmul.f32 %v439, %v313
  %443 = vrot.lane.b32.xlu0 %v440, 32
  %v444 = vpop.permute.xlu0 %443
  %v446 = vmul.f32 %v439, %v444
  %448 = vrot.lane.b32.xlu0 %v446, 32
  %v449 = vpop.permute.xlu0 %448
  %v451 = vadd.f32 %v441, %v449
  %v452 = vtanh.pop %v451
  %454 = vrot.lane.b32.xlu0 %v452, 32
  %v455 = vpop.permute.xlu0 %454
  %v457 = vmul.f32 %v439, %v455
  %v458 = vpack.c.bf16 %v457, %v457
  %v459 = vpack.c.bf16 %v397, %v397
  %461 = vrot.lane.b32.xlu0 %v459, 64
  %v462 = vpop.permute.xlu0 %461
  %v464 = vsel %vm97, %v462, 0
  %466 = vmatpush.bf16.msra.mxu0 0
  %467 = vmatpush.bf16.msra.mxu0 0
  %468 = vmatpush.bf16.msra.mxu0 0
  %469 = vmatpush.bf16.msra.mxu0 0
  %470 = vmatpush.bf16.msra.mxu0 0
  %471 = vmatpush.bf16.msra.mxu0 0
  %472 = vmatpush.bf16.msra.mxu0 %v167
  %473 = vmatpush.bf16.msra.mxu0 %v166
  %474 = vmatmul.bf16.gmra.mxu0 %v464
  %v475 = vpop.f32.mrf.mxu0
  %v476 = vadd.f32 0.0, %v475
  %v477 = vpop.f32.mrf.mxu0
  %478 = vdwg.mxu0
  %480 = vrot.lane.b32.xlu0 %v458, 64
  %v481 = vpop.permute.xlu0 %480
  %v483 = vsel %vm97, %v481, 0
  %485 = vmatpush.bf16.msra.mxu0 0
  %486 = vmatpush.bf16.msra.mxu0 0
  %487 = vmatpush.bf16.msra.mxu0 0
  %488 = vmatpush.bf16.msra.mxu0 0
  %489 = vmatpush.bf16.msra.mxu0 0
  %490 = vmatpush.bf16.msra.mxu0 0
  %491 = vmatpush.bf16.msra.mxu0 %v198
  %492 = vmatpush.bf16.msra.mxu0 %v197
  %493 = vmatmul.bf16.gmra.mxu0 %v483
  %v494 = vpop.f32.mrf.mxu0
  %v495 = vadd.f32 %v476, %v494
  %v496 = vpop.f32.mrf.mxu0
  %497 = vdwg.mxu0
  %v498 = vadd.f32 %v495, %v73
  %v499 = vxor.u32 %v498, 2147483648
  %v500 = vmul.f32 %v499, 1.442695
  %v501 = vpow.pop %v500
  %v502 = vadd.f32 %v501, 1.0
  %v503 = vrcp.pop %v502
  %v504 = vmul.f32 %v502, %v503
  %v505 = vsub.f32 1.0, %v504
  %v506 = vmul.f32 %v503, %v505
  %v507 = vadd.f32 %v503, %v506
  %vm508 = vweird.f32 %v502
  %vm509 = vweird.f32 %v503
  %vm510 = vmor %vm508, %vm509
  %v511 = vsel %vm510, %v503, %v507
  %v512 = vand.u32 2147483647, %v502
  %vm513 = vcmp.eq.f32.partialorder %v512, 8.507059e+37
  %v514 = vand.u32 %v502, 2147483648
  %v515 = vor.u32 1.1754944e-38, %v514
  %v516 = vsel %vm513, %v515, %v511
  %v517 = vmul.f32 1.0, %v516
  %v518 = vtanh.pop %v498
  %v519 = vmul.f32 %v517, %v391
  %521 = vrot.lane.b32.xlu0 %v518, 32
  %v522 = vpop.permute.xlu0 %521
  %v524 = vmul.f32 %v517, %v522
  %526 = vrot.lane.b32.xlu0 %v524, 32
  %v527 = vpop.permute.xlu0 %526
  %v529 = vadd.f32 %v519, %v527
  %v530 = vtanh.pop %v529
  %532 = vrot.lane.b32.xlu0 %v530, 32
  %v533 = vpop.permute.xlu0 %532
  %v535 = vmul.f32 %v517, %v533
  %537 = vrot.lane.b32.xlu0 %v535, 64
  %v538 = vpop.permute.xlu0 %537
  %540 = vst.msk [vmem:[#allocation4 + $0x4] sm:$0x3] %vm263, %v538
  %s541 = scalar_lea.vmem %s0, 3
  %v542 = vld [vmem:[%s541] sm:$0x1]
  %v543 = vunpack.c.l.bf16 %v542
  %v544 = vadd.f32 %v543, %v61
  %545 = vmatpush.bf16.msra.mxu0 0
  %546 = vmatpush.bf16.msra.mxu0 0
  %547 = vmatpush.bf16.msra.mxu0 0
  %548 = vmatpush.bf16.msra.mxu0 0
  %549 = vmatpush.bf16.msra.mxu0 0
  %550 = vmatpush.bf16.msra.mxu0 0
  %551 = vmatpush.bf16.msra.mxu0 %v94
  %552 = vmatpush.bf16.msra.mxu0 %v93
  %553 = vmatmul.bf16.gmra.mxu0 %v483
  %v554 = vpop.f32.mrf.mxu0
  %v555 = vadd.f32 0.0, %v554
  %v556 = vpop.f32.mrf.mxu0
  %557 = vdwg.mxu0
  %v558 = vadd.f32 %v544, %v555
  %v559 = vxor.u32 %v558, 2147483648
  %v560 = vmul.f32 %v559, 1.442695
  %v561 = vpow.pop %v560
  %v562 = vadd.f32 %v561, 1.0
  %v563 = vrcp.pop %v562
  %v564 = vmul.f32 %v562, %v563
  %v565 = vsub.f32 1.0, %v564
  %v566 = vmul.f32 %v563, %v565
  %v567 = vadd.f32 %v563, %v566
  %vm568 = vweird.f32 %v562
  %vm569 = vweird.f32 %v563
  %vm570 = vmor %vm568, %vm569
  %v571 = vsel %vm570, %v563, %v567
  %v572 = vand.u32 2147483647, %v562
  %vm573 = vcmp.eq.f32.partialorder %v572, 8.507059e+37
  %v574 = vand.u32 %v562, 2147483648
  %v575 = vor.u32 1.1754944e-38, %v574
  %v576 = vsel %vm573, %v575, %v571
  %v577 = vmul.f32 1.0, %v576
  %v578 = vtanh.pop %v558
  %v579 = vmul.f32 %v577, %v451
  %581 = vrot.lane.b32.xlu0 %v578, 32
  %v582 = vpop.permute.xlu0 %581
  %v584 = vmul.f32 %v577, %v582
  %586 = vrot.lane.b32.xlu0 %v584, 32
  %v587 = vpop.permute.xlu0 %586
  %v589 = vadd.f32 %v579, %v587
  %v590 = vtanh.pop %v589
  %592 = vrot.lane.b32.xlu0 %v590, 32
  %v593 = vpop.permute.xlu0 %592
  %v595 = vmul.f32 %v577, %v593
  %v596 = vpack.c.bf16 %v595, %v595
  %v597 = vpack.c.bf16 %v535, %v535
  %599 = vrot.lane.b32.xlu0 %v597, 64
  %v600 = vpop.permute.xlu0 %599
  %v602 = vsel %vm97, %v600, 0
  %604 = vmatpush.bf16.msra.mxu0 0
  %605 = vmatpush.bf16.msra.mxu0 0
  %606 = vmatpush.bf16.msra.mxu0 0
  %607 = vmatpush.bf16.msra.mxu0 0
  %608 = vmatpush.bf16.msra.mxu0 0
  %609 = vmatpush.bf16.msra.mxu0 0
  %610 = vmatpush.bf16.msra.mxu0 %v167
  %611 = vmatpush.bf16.msra.mxu0 %v166
  %612 = vmatmul.bf16.gmra.mxu0 %v602
  %v613 = vpop.f32.mrf.mxu0
  %v614 = vadd.f32 0.0, %v613
  %v615 = vpop.f32.mrf.mxu0
  %616 = vdwg.mxu0
  %618 = vrot.lane.b32.xlu0 %v596, 64
  %v619 = vpop.permute.xlu0 %618
  %v621 = vsel %vm97, %v619, 0
  %623 = vmatpush.bf16.msra.mxu0 0
  %624 = vmatpush.bf16.msra.mxu0 0
  %625 = vmatpush.bf16.msra.mxu0 0
  %626 = vmatpush.bf16.msra.mxu0 0
  %627 = vmatpush.bf16.msra.mxu0 0
  %628 = vmatpush.bf16.msra.mxu0 0
  %629 = vmatpush.bf16.msra.mxu0 %v198
  %630 = vmatpush.bf16.msra.mxu0 %v197
  %631 = vmatmul.bf16.gmra.mxu0 %v621
  %v632 = vpop.f32.mrf.mxu0
  %v633 = vadd.f32 %v614, %v632
  %v634 = vpop.f32.mrf.mxu0
  %635 = vdwg.mxu0
  %v636 = vadd.f32 %v633, %v73
  %v637 = vxor.u32 %v636, 2147483648
  %v638 = vmul.f32 %v637, 1.442695
  %v639 = vpow.pop %v638
  %v640 = vadd.f32 %v639, 1.0
  %v641 = vrcp.pop %v640
  %v642 = vmul.f32 %v640, %v641
  %v643 = vsub.f32 1.0, %v642
  %v644 = vmul.f32 %v641, %v643
  %v645 = vadd.f32 %v641, %v644
  %vm646 = vweird.f32 %v640
  %vm647 = vweird.f32 %v641
  %vm648 = vmor %vm646, %vm647
  %v649 = vsel %vm648, %v641, %v645
  %v650 = vand.u32 2147483647, %v640
  %vm651 = vcmp.eq.f32.partialorder %v650, 8.507059e+37
  %v652 = vand.u32 %v640, 2147483648
  %v653 = vor.u32 1.1754944e-38, %v652
  %v654 = vsel %vm651, %v653, %v649
  %v655 = vmul.f32 1.0, %v654
  %v656 = vtanh.pop %v636
  %v657 = vmul.f32 %v655, %v529
  %659 = vrot.lane.b32.xlu0 %v656, 32
  %v660 = vpop.permute.xlu0 %659
  %v662 = vmul.f32 %v655, %v660
  %664 = vrot.lane.b32.xlu0 %v662, 32
  %v665 = vpop.permute.xlu0 %664
  %v667 = vadd.f32 %v657, %v665
  %v668 = vtanh.pop %v667
  %670 = vrot.lane.b32.xlu0 %v668, 32
  %v671 = vpop.permute.xlu0 %670
  %v673 = vmul.f32 %v655, %v671
  %675 = vrot.lane.b32.xlu0 %v673, 64
  %v676 = vpop.permute.xlu0 %675
  %678 = vst.msk [vmem:[#allocation4 + $0x6] sm:$0x3] %vm263, %v676
  %s679 = scalar_lea.vmem %s0, 4
  %v680 = vld [vmem:[%s679] sm:$0x1]
  %v681 = vunpack.c.l.bf16 %v680
  %v682 = vadd.f32 %v681, %v61
  %683 = vmatpush.bf16.msra.mxu0 0
  %684 = vmatpush.bf16.msra.mxu0 0
  %685 = vmatpush.bf16.msra.mxu0 0
  %686 = vmatpush.bf16.msra.mxu0 0
  %687 = vmatpush.bf16.msra.mxu0 0
  %688 = vmatpush.bf16.msra.mxu0 0
  %689 = vmatpush.bf16.msra.mxu0 %v94
  %690 = vmatpush.bf16.msra.mxu0 %v93
  %691 = vmatmul.bf16.gmra.mxu0 %v621
  %v692 = vpop.f32.mrf.mxu0
  %v693 = vadd.f32 0.0, %v692
  %v694 = vpop.f32.mrf.mxu0
  %695 = vdwg.mxu0
  %v696 = vadd.f32 %v682, %v693
  %v697 = vxor.u32 %v696, 2147483648
  %v698 = vmul.f32 %v697, 1.442695
  %v699 = vpow.pop %v698
  %v700 = vadd.f32 %v699, 1.0
  %v701 = vrcp.pop %v700
  %v702 = vmul.f32 %v700, %v701
  %v703 = vsub.f32 1.0, %v702
  %v704 = vmul.f32 %v701, %v703
  %v705 = vadd.f32 %v701, %v704
  %vm706 = vweird.f32 %v700
  %vm707 = vweird.f32 %v701
  %vm708 = vmor %vm706, %vm707
  %v709 = vsel %vm708, %v701, %v705
  %v710 = vand.u32 2147483647, %v700
  %vm711 = vcmp.eq.f32.partialorder %v710, 8.507059e+37
  %v712 = vand.u32 %v700, 2147483648
  %v713 = vor.u32 1.1754944e-38, %v712
  %v714 = vsel %vm711, %v713, %v709
  %v715 = vmul.f32 1.0, %v714
  %v716 = vtanh.pop %v696
  %v717 = vmul.f32 %v715, %v589
  %719 = vrot.lane.b32.xlu0 %v716, 32
  %v720 = vpop.permute.xlu0 %719
  %v722 = vmul.f32 %v715, %v720
  %724 = vrot.lane.b32.xlu0 %v722, 32
  %v725 = vpop.permute.xlu0 %724
  %v727 = vadd.f32 %v717, %v725
  %v728 = vtanh.pop %v727
  %730 = vrot.lane.b32.xlu0 %v728, 32
  %v731 = vpop.permute.xlu0 %730
  %v733 = vmul.f32 %v715, %v731
  %v734 = vpack.c.bf16 %v733, %v733
  %v735 = vpack.c.bf16 %v673, %v673
  %737 = vrot.lane.b32.xlu0 %v735, 64
  %v738 = vpop.permute.xlu0 %737
  %v740 = vsel %vm97, %v738, 0
  %742 = vmatpush.bf16.msra.mxu0 0
  %743 = vmatpush.bf16.msra.mxu0 0
  %744 = vmatpush.bf16.msra.mxu0 0
  %745 = vmatpush.bf16.msra.mxu0 0
  %746 = vmatpush.bf16.msra.mxu0 0
  %747 = vmatpush.bf16.msra.mxu0 0
  %748 = vmatpush.bf16.msra.mxu0 %v167
  %749 = vmatpush.bf16.msra.mxu0 %v166
  %750 = vmatmul.bf16.gmra.mxu0 %v740
  %v751 = vpop.f32.mrf.mxu0
  %v752 = vadd.f32 0.0, %v751
  %v753 = vpop.f32.mrf.mxu0
  %754 = vdwg.mxu0
  %756 = vrot.lane.b32.xlu0 %v734, 64
  %v757 = vpop.permute.xlu0 %756
  %v759 = vsel %vm97, %v757, 0
  %761 = vmatpush.bf16.msra.mxu0 0
  %762 = vmatpush.bf16.msra.mxu0 0
  %763 = vmatpush.bf16.msra.mxu0 0
  %764 = vmatpush.bf16.msra.mxu0 0
  %765 = vmatpush.bf16.msra.mxu0 0
  %766 = vmatpush.bf16.msra.mxu0 0
  %767 = vmatpush.bf16.msra.mxu0 %v198
  %768 = vmatpush.bf16.msra.mxu0 %v197
  %769 = vmatmul.bf16.gmra.mxu0 %v759
  %v770 = vpop.f32.mrf.mxu0
  %v771 = vadd.f32 %v752, %v770
  %v772 = vpop.f32.mrf.mxu0
  %773 = vdwg.mxu0
  %v774 = vadd.f32 %v771, %v73
  %v775 = vxor.u32 %v774, 2147483648
  %v776 = vmul.f32 %v775, 1.442695
  %v777 = vpow.pop %v776
  %v778 = vadd.f32 %v777, 1.0
  %v779 = vrcp.pop %v778
  %v780 = vmul.f32 %v778, %v779
  %v781 = vsub.f32 1.0, %v780
  %v782 = vmul.f32 %v779, %v781
  %v783 = vadd.f32 %v779, %v782
  %vm784 = vweird.f32 %v778
  %vm785 = vweird.f32 %v779
  %vm786 = vmor %vm784, %vm785
  %v787 = vsel %vm786, %v779, %v783
  %v788 = vand.u32 2147483647, %v778
  %vm789 = vcmp.eq.f32.partialorder %v788, 8.507059e+37
  %v790 = vand.u32 %v778, 2147483648
  %v791 = vor.u32 1.1754944e-38, %v790
  %v792 = vsel %vm789, %v791, %v787
  %v793 = vmul.f32 1.0, %v792
  %v794 = vtanh.pop %v774
  %v795 = vmul.f32 %v793, %v667
  %797 = vrot.lane.b32.xlu0 %v794, 32
  %v798 = vpop.permute.xlu0 %797
  %v800 = vmul.f32 %v793, %v798
  %802 = vrot.lane.b32.xlu0 %v800, 32
  %v803 = vpop.permute.xlu0 %802
  %v805 = vadd.f32 %v795, %v803
  %v806 = vtanh.pop %v805
  %808 = vrot.lane.b32.xlu0 %v806, 32
  %v809 = vpop.permute.xlu0 %808
  %v811 = vmul.f32 %v793, %v809
  %813 = vrot.lane.b32.xlu0 %v811, 64
  %v814 = vpop.permute.xlu0 %813
  %816 = vst.msk [vmem:[#allocation4 + $0x8] sm:$0x3] %vm263, %v814
  %s817 = scalar_lea.vmem %s0, 5
  %v818 = vld [vmem:[%s817] sm:$0x1]
  %v819 = vunpack.c.l.bf16 %v818
  %v820 = vadd.f32 %v819, %v61
  %821 = vmatpush.bf16.msra.mxu0 0
  %822 = vmatpush.bf16.msra.mxu0 0
  %823 = vmatpush.bf16.msra.mxu0 0
  %824 = vmatpush.bf16.msra.mxu0 0
  %825 = vmatpush.bf16.msra.mxu0 0
  %826 = vmatpush.bf16.msra.mxu0 0
  %827 = vmatpush.bf16.msra.mxu0 %v94
  %828 = vmatpush.bf16.msra.mxu0 %v93
  %829 = vmatmul.bf16.gmra.mxu0 %v759
  %v830 = vpop.f32.mrf.mxu0
  %v831 = vadd.f32 0.0, %v830
  %v832 = vpop.f32.mrf.mxu0
  %833 = vdwg.mxu0
  %v834 = vadd.f32 %v820, %v831
  %v835 = vxor.u32 %v834, 2147483648
  %v836 = vmul.f32 %v835, 1.442695
  %v837 = vpow.pop %v836
  %v838 = vadd.f32 %v837, 1.0
  %v839 = vrcp.pop %v838
  %v840 = vmul.f32 %v838, %v839
  %v841 = vsub.f32 1.0, %v840
  %v842 = vmul.f32 %v839, %v841
  %v843 = vadd.f32 %v839, %v842
  %vm844 = vweird.f32 %v838
  %vm845 = vweird.f32 %v839
  %vm846 = vmor %vm844, %vm845
  %v847 = vsel %vm846, %v839, %v843
  %v848 = vand.u32 2147483647, %v838
  %vm849 = vcmp.eq.f32.partialorder %v848, 8.507059e+37
  %v850 = vand.u32 %v838, 2147483648
  %v851 = vor.u32 1.1754944e-38, %v850
  %v852 = vsel %vm849, %v851, %v847
  %v853 = vmul.f32 1.0, %v852
  %v854 = vtanh.pop %v834
  %v855 = vmul.f32 %v853, %v727
  %857 = vrot.lane.b32.xlu0 %v854, 32
  %v858 = vpop.permute.xlu0 %857
  %v860 = vmul.f32 %v853, %v858
  %862 = vrot.lane.b32.xlu0 %v860, 32
  %v863 = vpop.permute.xlu0 %862
  %v865 = vadd.f32 %v855, %v863
  %v866 = vtanh.pop %v865
  %868 = vrot.lane.b32.xlu0 %v866, 32
  %v869 = vpop.permute.xlu0 %868
  %v871 = vmul.f32 %v853, %v869
  %v872 = vpack.c.bf16 %v871, %v871
  %v873 = vpack.c.bf16 %v811, %v811
  %875 = vrot.lane.b32.xlu0 %v873, 64
  %v876 = vpop.permute.xlu0 %875
  %v878 = vsel %vm97, %v876, 0
  %880 = vmatpush.bf16.msra.mxu0 0
  %881 = vmatpush.bf16.msra.mxu0 0
  %882 = vmatpush.bf16.msra.mxu0 0
  %883 = vmatpush.bf16.msra.mxu0 0
  %884 = vmatpush.bf16.msra.mxu0 0
  %885 = vmatpush.bf16.msra.mxu0 0
  %886 = vmatpush.bf16.msra.mxu0 %v167
  %887 = vmatpush.bf16.msra.mxu0 %v166
  %888 = vmatmul.bf16.gmra.mxu0 %v878
  %v889 = vpop.f32.mrf.mxu0
  %v890 = vadd.f32 0.0, %v889
  %v891 = vpop.f32.mrf.mxu0
  %892 = vdwg.mxu0
  %894 = vrot.lane.b32.xlu0 %v872, 64
  %v895 = vpop.permute.xlu0 %894
  %v897 = vsel %vm97, %v895, 0
  %899 = vmatpush.bf16.msra.mxu0 0
  %900 = vmatpush.bf16.msra.mxu0 0
  %901 = vmatpush.bf16.msra.mxu0 0
  %902 = vmatpush.bf16.msra.mxu0 0
  %903 = vmatpush.bf16.msra.mxu0 0
  %904 = vmatpush.bf16.msra.mxu0 0
  %905 = vmatpush.bf16.msra.mxu0 %v198
  %906 = vmatpush.bf16.msra.mxu0 %v197
  %907 = vmatmul.bf16.gmra.mxu0 %v897
  %v908 = vpop.f32.mrf.mxu0
  %v909 = vadd.f32 %v890, %v908
  %v910 = vpop.f32.mrf.mxu0
  %911 = vdwg.mxu0
  %v912 = vadd.f32 %v909, %v73
  %v913 = vxor.u32 %v912, 2147483648
  %v914 = vmul.f32 %v913, 1.442695
  %v915 = vpow.pop %v914
  %v916 = vadd.f32 %v915, 1.0
  %v917 = vrcp.pop %v916
  %v918 = vmul.f32 %v916, %v917
  %v919 = vsub.f32 1.0, %v918
  %v920 = vmul.f32 %v917, %v919
  %v921 = vadd.f32 %v917, %v920
  %vm922 = vweird.f32 %v916
  %vm923 = vweird.f32 %v917
  %vm924 = vmor %vm922, %vm923
  %v925 = vsel %vm924, %v917, %v921
  %v926 = vand.u32 2147483647, %v916
  %vm927 = vcmp.eq.f32.partialorder %v926, 8.507059e+37
  %v928 = vand.u32 %v916, 2147483648
  %v929 = vor.u32 1.1754944e-38, %v928
  %v930 = vsel %vm927, %v929, %v925
  %v931 = vmul.f32 1.0, %v930
  %v932 = vtanh.pop %v912
  %v933 = vmul.f32 %v931, %v805
  %935 = vrot.lane.b32.xlu0 %v932, 32
  %v936 = vpop.permute.xlu0 %935
  %v938 = vmul.f32 %v931, %v936
  %940 = vrot.lane.b32.xlu0 %v938, 32
  %v941 = vpop.permute.xlu0 %940
  %v943 = vadd.f32 %v933, %v941
  %v944 = vtanh.pop %v943
  %946 = vrot.lane.b32.xlu0 %v944, 32
  %v947 = vpop.permute.xlu0 %946
  %v949 = vmul.f32 %v931, %v947
  %951 = vrot.lane.b32.xlu0 %v949, 64
  %v952 = vpop.permute.xlu0 %951
  %954 = vst.msk [vmem:[#allocation4 + $0xa] sm:$0x3] %vm263, %v952
  %s955 = scalar_lea.vmem %s0, 6
  %v956 = vld [vmem:[%s955] sm:$0x1]
  %v957 = vunpack.c.l.bf16 %v956
  %v958 = vadd.f32 %v957, %v61
  %959 = vmatpush.bf16.msra.mxu0 0
  %960 = vmatpush.bf16.msra.mxu0 0
  %961 = vmatpush.bf16.msra.mxu0 0
  %962 = vmatpush.bf16.msra.mxu0 0
  %963 = vmatpush.bf16.msra.mxu0 0
  %964 = vmatpush.bf16.msra.mxu0 0
  %965 = vmatpush.bf16.msra.mxu0 %v94
  %966 = vmatpush.bf16.msra.mxu0 %v93
  %967 = vmatmul.bf16.gmra.mxu0 %v897
  %v968 = vpop.f32.mrf.mxu0
  %v969 = vadd.f32 0.0, %v968
  %v970 = vpop.f32.mrf.mxu0
  %971 = vdwg.mxu0
  %v972 = vadd.f32 %v958, %v969
  %v973 = vxor.u32 %v972, 2147483648
  %v974 = vmul.f32 %v973, 1.442695
  %v975 = vpow.pop %v974
  %v976 = vadd.f32 %v975, 1.0
  %v977 = vrcp.pop %v976
  %v978 = vmul.f32 %v976, %v977
  %v979 = vsub.f32 1.0, %v978
  %v980 = vmul.f32 %v977, %v979
  %v981 = vadd.f32 %v977, %v980
  %vm982 = vweird.f32 %v976
  %vm983 = vweird.f32 %v977
  %vm984 = vmor %vm982, %vm983
  %v985 = vsel %vm984, %v977, %v981
  %v986 = vand.u32 2147483647, %v976
  %vm987 = vcmp.eq.f32.partialorder %v986, 8.507059e+37
  %v988 = vand.u32 %v976, 2147483648
  %v989 = vor.u32 1.1754944e-38, %v988
  %v990 = vsel %vm987, %v989, %v985
  %v991 = vmul.f32 1.0, %v990
  %v992 = vtanh.pop %v972
  %v993 = vmul.f32 %v991, %v865
  %995 = vrot.lane.b32.xlu0 %v992, 32
  %v996 = vpop.permute.xlu0 %995
  %v998 = vmul.f32 %v991, %v996
  %1000 = vrot.lane.b32.xlu0 %v998, 32
  %v1001 = vpop.permute.xlu0 %1000
  %v1003 = vadd.f32 %v993, %v1001
  %v1004 = vtanh.pop %v1003
  %1006 = vrot.lane.b32.xlu0 %v1004, 32
  %v1007 = vpop.permute.xlu0 %1006
  %v1009 = vmul.f32 %v991, %v1007
  %v1010 = vpack.c.bf16 %v1009, %v1009
  %v1011 = vpack.c.bf16 %v949, %v949
  %1013 = vrot.lane.b32.xlu0 %v1011, 64
  %v1014 = vpop.permute.xlu0 %1013
  %v1016 = vsel %vm97, %v1014, 0
  %1018 = vmatpush.bf16.msra.mxu0 0
  %1019 = vmatpush.bf16.msra.mxu0 0
  %1020 = vmatpush.bf16.msra.mxu0 0
  %1021 = vmatpush.bf16.msra.mxu0 0
  %1022 = vmatpush.bf16.msra.mxu0 0
  %1023 = vmatpush.bf16.msra.mxu0 0
  %1024 = vmatpush.bf16.msra.mxu0 %v167
  %1025 = vmatpush.bf16.msra.mxu0 %v166
  %1026 = vmatmul.bf16.gmra.mxu0 %v1016
  %v1027 = vpop.f32.mrf.mxu0
  %v1028 = vadd.f32 0.0, %v1027
  %v1029 = vpop.f32.mrf.mxu0
  %1030 = vdwg.mxu0
  %1032 = vrot.lane.b32.xlu0 %v1010, 64
  %v1033 = vpop.permute.xlu0 %1032
  %v1035 = vsel %vm97, %v1033, 0
  %1037 = vmatpush.bf16.msra.mxu0 0
  %1038 = vmatpush.bf16.msra.mxu0 0
  %1039 = vmatpush.bf16.msra.mxu0 0
  %1040 = vmatpush.bf16.msra.mxu0 0
  %1041 = vmatpush.bf16.msra.mxu0 0
  %1042 = vmatpush.bf16.msra.mxu0 0
  %1043 = vmatpush.bf16.msra.mxu0 %v198
  %1044 = vmatpush.bf16.msra.mxu0 %v197
  %1045 = vmatmul.bf16.gmra.mxu0 %v1035
  %v1046 = vpop.f32.mrf.mxu0
  %v1047 = vadd.f32 %v1028, %v1046
  %v1048 = vpop.f32.mrf.mxu0
  %1049 = vdwg.mxu0
  %v1050 = vadd.f32 %v1047, %v73
  %v1051 = vxor.u32 %v1050, 2147483648
  %v1052 = vmul.f32 %v1051, 1.442695
  %v1053 = vpow.pop %v1052
  %v1054 = vadd.f32 %v1053, 1.0
  %v1055 = vrcp.pop %v1054
  %v1056 = vmul.f32 %v1054, %v1055
  %v1057 = vsub.f32 1.0, %v1056
  %v1058 = vmul.f32 %v1055, %v1057
  %v1059 = vadd.f32 %v1055, %v1058
  %vm1060 = vweird.f32 %v1054
  %vm1061 = vweird.f32 %v1055
  %vm1062 = vmor %vm1060, %vm1061
  %v1063 = vsel %vm1062, %v1055, %v1059
  %v1064 = vand.u32 2147483647, %v1054
  %vm1065 = vcmp.eq.f32.partialorder %v1064, 8.507059e+37
  %v1066 = vand.u32 %v1054, 2147483648
  %v1067 = vor.u32 1.1754944e-38, %v1066
  %v1068 = vsel %vm1065, %v1067, %v1063
  %v1069 = vmul.f32 1.0, %v1068
  %v1070 = vtanh.pop %v1050
  %v1071 = vmul.f32 %v1069, %v943
  %1073 = vrot.lane.b32.xlu0 %v1070, 32
  %v1074 = vpop.permute.xlu0 %1073
  %v1076 = vmul.f32 %v1069, %v1074
  %1078 = vrot.lane.b32.xlu0 %v1076, 32
  %v1079 = vpop.permute.xlu0 %1078
  %v1081 = vadd.f32 %v1071, %v1079
  %v1082 = vtanh.pop %v1081
  %1084 = vrot.lane.b32.xlu0 %v1082, 32
  %v1085 = vpop.permute.xlu0 %1084
  %v1087 = vmul.f32 %v1069, %v1085
  %1089 = vrot.lane.b32.xlu0 %v1087, 64
  %v1090 = vpop.permute.xlu0 %1089
  %1092 = vst.msk [vmem:[#allocation4 + $0xc] sm:$0x3] %vm263, %v1090
  %s1093 = scalar_lea.vmem %s0, 7
  %v1094 = vld [vmem:[%s1093] sm:$0x1]
  %v1095 = vunpack.c.l.bf16 %v1094
  %v1096 = vadd.f32 %v1095, %v61
  %1097 = vmatpush.bf16.msra.mxu0 0
  %1098 = vmatpush.bf16.msra.mxu0 0
  %1099 = vmatpush.bf16.msra.mxu0 0
  %1100 = vmatpush.bf16.msra.mxu0 0
  %1101 = vmatpush.bf16.msra.mxu0 0
  %1102 = vmatpush.bf16.msra.mxu0 0
  %1103 = vmatpush.bf16.msra.mxu0 %v94
  %1104 = vmatpush.bf16.msra.mxu0 %v93
  %1105 = vmatmul.bf16.gmra.mxu0 %v1035
  %v1106 = vpop.f32.mrf.mxu0
  %v1107 = vadd.f32 0.0, %v1106
  %v1108 = vpop.f32.mrf.mxu0
  %1109 = vdwg.mxu0
  %v1110 = vadd.f32 %v1096, %v1107
  %v1111 = vxor.u32 %v1110, 2147483648
  %v1112 = vmul.f32 %v1111, 1.442695
  %v1113 = vpow.pop %v1112
  %v1114 = vadd.f32 %v1113, 1.0
  %v1115 = vrcp.pop %v1114
  %v1116 = vmul.f32 %v1114, %v1115
  %v1117 = vsub.f32 1.0, %v1116
  %v1118 = vmul.f32 %v1115, %v1117
  %v1119 = vadd.f32 %v1115, %v1118
  %vm1120 = vweird.f32 %v1114
  %vm1121 = vweird.f32 %v1115
  %vm1122 = vmor %vm1120, %vm1121
  %v1123 = vsel %vm1122, %v1115, %v1119
  %v1124 = vand.u32 2147483647, %v1114
  %vm1125 = vcmp.eq.f32.partialorder %v1124, 8.507059e+37
  %v1126 = vand.u32 %v1114, 2147483648
  %v1127 = vor.u32 1.1754944e-38, %v1126
  %v1128 = vsel %vm1125, %v1127, %v1123
  %v1129 = vmul.f32 1.0, %v1128
  %v1130 = vtanh.pop %v1110
  %v1131 = vmul.f32 %v1129, %v1003
  %1133 = vrot.lane.b32.xlu0 %v1130, 32
  %v1134 = vpop.permute.xlu0 %1133
  %v1136 = vmul.f32 %v1129, %v1134
  %1138 = vrot.lane.b32.xlu0 %v1136, 32
  %v1139 = vpop.permute.xlu0 %1138
  %v1141 = vadd.f32 %v1131, %v1139
  %v1142 = vtanh.pop %v1141
  %1144 = vrot.lane.b32.xlu0 %v1142, 32
  %v1145 = vpop.permute.xlu0 %1144
  %v1147 = vmul.f32 %v1129, %v1145
  %v1148 = vpack.c.bf16 %v1147, %v1147
  %v1149 = vpack.c.bf16 %v1087, %v1087
  %1151 = vrot.lane.b32.xlu0 %v1149, 64
  %v1152 = vpop.permute.xlu0 %1151
  %v1154 = vsel %vm97, %v1152, 0
  %1156 = vmatpush.bf16.msra.mxu0 0
  %1157 = vmatpush.bf16.msra.mxu0 0
  %1158 = vmatpush.bf16.msra.mxu0 0
  %1159 = vmatpush.bf16.msra.mxu0 0
  %1160 = vmatpush.bf16.msra.mxu0 0
  %1161 = vmatpush.bf16.msra.mxu0 0
  %1162 = vmatpush.bf16.msra.mxu0 %v167
  %1163 = vmatpush.bf16.msra.mxu0 %v166
  %1164 = vmatmul.bf16.gmra.mxu0 %v1154
  %v1165 = vpop.f32.mrf.mxu0
  %v1166 = vadd.f32 0.0, %v1165
  %v1167 = vpop.f32.mrf.mxu0
  %1168 = vdwg.mxu0
  %1170 = vrot.lane.b32.xlu0 %v1148, 64
  %v1171 = vpop.permute.xlu0 %1170
  %v1173 = vsel %vm97, %v1171, 0
  %1175 = vmatpush.bf16.msra.mxu0 0
  %1176 = vmatpush.bf16.msra.mxu0 0
  %1177 = vmatpush.bf16.msra.mxu0 0
  %1178 = vmatpush.bf16.msra.mxu0 0
  %1179 = vmatpush.bf16.msra.mxu0 0
  %1180 = vmatpush.bf16.msra.mxu0 0
  %1181 = vmatpush.bf16.msra.mxu0 %v198
  %1182 = vmatpush.bf16.msra.mxu0 %v197
  %1183 = vmatmul.bf16.gmra.mxu0 %v1173
  %v1184 = vpop.f32.mrf.mxu0
  %v1185 = vadd.f32 %v1166, %v1184
  %v1186 = vpop.f32.mrf.mxu0
  %1187 = vdwg.mxu0
  %v1188 = vadd.f32 %v1185, %v73
  %v1189 = vxor.u32 %v1188, 2147483648
  %v1190 = vmul.f32 %v1189, 1.442695
  %v1191 = vpow.pop %v1190
  %v1192 = vadd.f32 %v1191, 1.0
  %v1193 = vrcp.pop %v1192
  %v1194 = vmul.f32 %v1192, %v1193
  %v1195 = vsub.f32 1.0, %v1194
  %v1196 = vmul.f32 %v1193, %v1195
  %v1197 = vadd.f32 %v1193, %v1196
  %vm1198 = vweird.f32 %v1192
  %vm1199 = vweird.f32 %v1193
  %vm1200 = vmor %vm1198, %vm1199
  %v1201 = vsel %vm1200, %v1193, %v1197
  %v1202 = vand.u32 2147483647, %v1192
  %vm1203 = vcmp.eq.f32.partialorder %v1202, 8.507059e+37
  %v1204 = vand.u32 %v1192, 2147483648
  %v1205 = vor.u32 1.1754944e-38, %v1204
  %v1206 = vsel %vm1203, %v1205, %v1201
  %v1207 = vmul.f32 1.0, %v1206
  %v1208 = vtanh.pop %v1188
  %v1209 = vmul.f32 %v1207, %v1081
  %1211 = vrot.lane.b32.xlu0 %v1208, 32
  %v1212 = vpop.permute.xlu0 %1211
  %v1214 = vmul.f32 %v1207, %v1212
  %1216 = vrot.lane.b32.xlu0 %v1214, 32
  %v1217 = vpop.permute.xlu0 %1216
  %v1219 = vadd.f32 %v1209, %v1217
  %v1220 = vtanh.pop %v1219
  %1222 = vrot.lane.b32.xlu0 %v1220, 32
  %v1223 = vpop.permute.xlu0 %1222
  %v1225 = vmul.f32 %v1207, %v1223
  %1227 = vrot.lane.b32.xlu0 %v1225, 64
  %v1228 = vpop.permute.xlu0 %1227
  %1230 = vst.msk [vmem:[#allocation4 + $0xe] sm:$0x3] %vm263, %v1228
  %1232 = vst [vmem:[#allocation1] ss:$4 sm:$0xff] %v1147
  %v1233 = vld.sshfl [vmem:[#allocation1] sm:$0xff pattern:$0x73625140]
  %1234 = vrot.lane.b32.xlu0 %v1233, 64
  %v1235 = vpop.permute.xlu0 %1234
  %1237 = vst.msk [vmem:[#allocation2] sm:$0x3] %vm263, %v1235
  %1239 = vst [vmem:[#allocation1] ss:$4 sm:$0xff] %v1141
  %v1240 = vld.sshfl [vmem:[#allocation1] sm:$0xff pattern:$0x73625140]
  %1241 = vrot.lane.b32.xlu0 %v1240, 96
  %v1242 = vpop.permute.xlu0 %1241
  %1244 = vst.msk [vmem:[#allocation3] sm:$0x3] %vm263, %v1242
  %1245 = vst.msk [vmem:[%s76] sm:$0x3] %vm263, %v1228
  %1247 = vrot.lane.b32.xlu0 %v1219, 96
  %v1248 = vpop.permute.xlu0 %1247
  %1250 = vst.msk [vmem:[%s79] sm:$0x3] %vm263, %v1248
  %v1251 = vld [vmem:[#allocation4] sm:$0xff]
  %v1252 = vld [vmem:[#allocation4 + $0x8] sm:$0xff]
  %v1253 = vpack.c.bf16 %v1252, %v1251
  %v1254 = vld [vmem:[%s8] sm:$0xf]
  %v1255 = vld [vmem:[%s8 + $0x4] sm:$0xf]
  %v1256 = vld [vmem:[%s8 + $0x8] sm:$0xf]
  %v1257 = vld [vmem:[%s8 + $0xc] sm:$0xf]
  %v1258 = vld [vmem:[%s9] sm:$0x1]
  %v1260 = vperm.slane %v1258, 0
  %v1266 = vunpack.c.l.b16 %v1254
  %v1267 = vunpack.c.l.b16 %v1255
  %v1268 = vunpack.c.l.b16 %v1256
  %v1269 = vunpack.c.l.b16 %v1257
  %v1270 = vpack.c.b16 %v1267, %v1266
  %v1271 = vpack.c.b16 %v1269, %v1268
  %v1275 = vsel %vm97, %v1253, 0
  %1277 = vmatpush.bf16.msra.mxu0 0
  %1278 = vmatpush.bf16.msra.mxu0 0
  %1279 = vmatpush.bf16.msra.mxu0 0
  %1280 = vmatpush.bf16.msra.mxu0 0
  %1281 = vmatpush.bf16.msra.mxu0 0
  %1282 = vmatpush.bf16.msra.mxu0 0
  %1283 = vmatpush.bf16.msra.mxu0 %v1271
  %1284 = vmatpush.bf16.msra.mxu0 %v1270
  %1285 = vmatmul.bf16.gmra.mxu0 %v1275
  %v1286 = vpop.f32.mrf.mxu0
  %v1287 = vadd.f32 %v1260, %v1286
  %v1288 = vpop.f32.mrf.mxu0
  %v1289 = vadd.f32 %v1260, %v1288
  %1290 = vdwg.mxu0
  %v1291 = vmax.f32 %v1287, 0.0
  %v1292 = vmax.f32 %v1289, 0.0
  %v1293 = vpack.c.bf16 %v1292, %v1291
  %v1294 = vld [vmem:[%s10] sm:$0xf]
  %v1295 = vld [vmem:[%s10 + $0x4] sm:$0xf]
  %v1296 = vld [vmem:[%s10 + $0x8] sm:$0xf]
  %v1297 = vld [vmem:[%s10 + $0xc] sm:$0xf]
  %v1298 = vld [vmem:[%s11] sm:$0x1]
  %v1300 = vperm.slane %v1298, 0
  %v1306 = vunpack.c.l.b16 %v1294
  %v1307 = vunpack.c.l.b16 %v1295
  %v1308 = vunpack.c.l.b16 %v1296
  %v1309 = vunpack.c.l.b16 %v1297
  %v1310 = vpack.c.b16 %v1307, %v1306
  %v1311 = vpack.c.b16 %v1309, %v1308
  %v1315 = vsel %vm97, %v1293, 0
  %1317 = vmatpush.bf16.msra.mxu0 0
  %1318 = vmatpush.bf16.msra.mxu0 0
  %1319 = vmatpush.bf16.msra.mxu0 0
  %1320 = vmatpush.bf16.msra.mxu0 0
  %1321 = vmatpush.bf16.msra.mxu0 0
  %1322 = vmatpush.bf16.msra.mxu0 0
  %1323 = vmatpush.bf16.msra.mxu0 %v1311
  %1324 = vmatpush.bf16.msra.mxu0 %v1310
  %1325 = vmatmul.bf16.gmra.mxu0 %v1315
  %v1326 = vpop.f32.mrf.mxu0
  %v1327 = vadd.f32 %v1300, %v1326
  %v1328 = vpop.f32.mrf.mxu0
  %v1329 = vadd.f32 %v1300, %v1328
  %1330 = vdwg.mxu0
  %1331 = vst [vmem:[%s12] sm:$0xff] %v1327
  %1332 = vst [vmem:[%s12 + $0x8] sm:$0xff] %v1329
  // Predicated region
  $region54: #{sentence_finisher_forward.1} parent=0 // pred_check
    _
  $region55: #{sentence_finisher_forward.1} parent=0 // pred_check_branch
    %1334 = sbr.rel (0) target = $region57
  $region56: #{sentence_finisher_forward.1} parent=0 // pred_region
    _
  $region57: #{sentence_finisher_forward.1} parent=0 // pred_fallthru
    _
  // Predicated region
  $region58: #{sentence_finisher_forward.1} parent=0 // pred_check
    _
  $region59: #{sentence_finisher_forward.1} parent=0 // pred_check_branch
    %1336 = sbr.rel (0) target = $region61
  $region60: #{sentence_finisher_forward.1} parent=0 // pred_region
    _
  $region61: #{sentence_finisher_forward.1} parent=0 // pred_fallthru
    _

</llo_original>
